<compile_context>
chip_gen: v7x
topology: tpu7x:2x2x1
jax: 0.10.0
libtpu: 0.0.40
codegen_flags: <defaults>
</compile_context>

<pallas_src>
import numpy as np
import jax
import jax.numpy as jnp
from jax.experimental import pallas as pl
from jax.experimental.pallas import tpu as pltpu

# ----------------------------- configuration --------------------------------
NUM_STATE_OBS = 45
NUM_REF_OBS = 64                       # num_obs - num_state_obs
NUM_OBS = NUM_STATE_OBS + NUM_REF_OBS  # 109
HORIZON = NUM_REF_OBS // 16            # 4
LATENT_CHANNELS = 6
BAND_OUTPUTS = 3                       # DWT levels J
ENCODER_HIDDEN = [32, 24, 16]
HIDDEN_DIMS = [32, 32]
NUM_ACTIONS = 12

PAD = 128                              # every layer width zero-padded to one lane block
ONE_LANE = PAD - 1                     # constant-1 lane used to fold biases into weights
TB = 256                               # batch tile (rows per grid step)

# db3 decomposition filters (pywt convention)
DB3_LO = np.array([0.035226291882100656, -0.08544127388224149, -0.13501102001039084,
                   0.4598775021193313, 0.8068915093133388, 0.3326705529509569])
DB3_HI = np.array([-0.3326705529509569, 0.8068915093133388, -0.4598775021193313,
                   -0.13501102001039084, 0.08544127388224149, 0.035226291882100656])


# ------------------- build the (linear) DWT operator offline ----------------
def _dwt1d_zero(x, filt):
    full = np.convolve(x, filt, mode="full")
    return full[1::2]


def _dwt2d_level(a):
    lo_w = np.stack([_dwt1d_zero(r, DB3_LO) for r in a], axis=0)
    hi_w = np.stack([_dwt1d_zero(r, DB3_HI) for r in a], axis=0)

    def cols(mat, filt):
        return np.stack([_dwt1d_zero(c, filt) for c in mat.T], axis=1)

    ll = cols(lo_w, DB3_LO)
    lh = cols(hi_w, DB3_LO)
    hl = cols(lo_w, DB3_HI)
    hh = cols(hi_w, DB3_HI)
    return ll, (lh, hl, hh)


def _dwt2d(a, levels):
    highs = []
    ll = a
    for _ in range(levels):
        ll, h = _dwt2d_level(ll)
        highs.append(h)
    return ll, highs


def build_dwt_operator(c, w, levels):
    """Matrix M of shape (c*w, dwt_size): (flattened plane) @ M = [yl, yh0, yh1, ...]."""
    cols = []
    for i in range(c * w):
        e = np.zeros(c * w)
        e[i] = 1.0
        ll, highs = _dwt2d(e.reshape(c, w), levels)
        parts = [ll.reshape(-1)]
        for (lh, hl, hh) in highs:
            parts.append(np.stack([lh, hl, hh], axis=0).reshape(-1))
        cols.append(np.concatenate(parts))
    return np.stack(cols, axis=0)


DWT_OP = build_dwt_operator(LATENT_CHANNELS, HORIZON, BAND_OUTPUTS)
DWT_SIZE = DWT_OP.shape[1]             # 200 for this config


# ------------------------------ Pallas kernel --------------------------------
def imitation_kernel(x_ref, w_ref, out_ref):
    # x_ref : (TB, PAD)      bf16 — sanitized obs, zero-padded lanes, lane ONE_LANE == 1.0
    # w_ref : (PAD, 6*PAD)   bf16 — [x->(h1|e1) fused | we2 | we3@w1b | w2 | w3] with every
    #                                bias folded into the ONE_LANE row of its block
    # out_ref: (TB, PAD)     f32  — cols 0:NUM_ACTIONS are the actions
    x = x_ref[...]

    def dot(a, b):      # bf16 MXU operands, f32 accumulation
        return jnp.dot(a, b, preferred_element_type=jnp.float32)

    def elu(v):         # bf16 elementwise; elu(0)=0 keeps pad lanes zero, elu(1)=1 keeps bias lane
        v = v.astype(jnp.bfloat16)
        return jnp.where(v > 0, v, jnp.exp(v) - 1.0)

    # one fused x-matmul (N=256): cols 0:128 = layer-1 x-contribution (+fused b1),
    # cols 128:256 = encoder layer-1 pre-activation (+be1). Lane-aligned slices are free.
    xw = dot(x, w_ref[:, :2 * PAD])
    e1 = elu(xw[:, PAD:])
    e2 = elu(dot(e1, w_ref[:, 2 * PAD:3 * PAD]))
    h1 = elu(xw[:, :PAD] + dot(e2, w_ref[:, 3 * PAD:4 * PAD]))
    h2 = elu(dot(h1, w_ref[:, 4 * PAD:5 * PAD]))
    out_ref[...] = dot(h2, w_ref[:, 5 * PAD:])


def imitation_forward(x, w_slab_bf16):
    assert x.shape[1] == NUM_OBS
    batch = x.shape[0]
    bp = ((batch + TB - 1) // TB) * TB
    # sanitize in f32 (exact torch semantics: NaN and +/-Inf -> 1e5), pad features to 128
    # lanes, set the constant-1 bias lane, cast to bf16 — one fused XLA op under jit.
    xs = jnp.where(jnp.isfinite(x), x, jnp.float32(1e5))
    xp = jnp.zeros((bp, PAD), jnp.float32)
    xp = xp.at[:batch, :NUM_OBS].set(xs)
    xp = xp.at[:, ONE_LANE].set(1.0)
    xb = xp.astype(jnp.bfloat16)

    out = pl.pallas_call(
        imitation_kernel,
        out_shape=jax.ShapeDtypeStruct((bp, PAD), jnp.float32),
        grid=(bp // TB,),
        in_specs=[pl.BlockSpec((TB, PAD), lambda i: (i, 0)),
                  pl.BlockSpec((PAD, 6 * PAD), lambda i: (0, 0))],
        out_specs=pl.BlockSpec((TB, PAD), lambda i: (i, 0)),
        compiler_params=pltpu.CompilerParams(dimension_semantics=("parallel",)),
    )(xb, w_slab_bf16)
    return out[:batch, :NUM_ACTIONS]


# ----------------------------- parameter setup -------------------------------
def init_raw_params(key):
    """Parameters in the original (unfolded) module structure."""
    ks = iter(jax.random.split(key, 32))

    def w(shape):
        return jax.random.normal(next(ks), shape, jnp.float32) / np.sqrt(shape[0])

    def b(n):
        return jnp.zeros((1, n), jnp.float32)

    dwt_op = jnp.asarray(DWT_OP, jnp.float32)
    w_phase_lin = w((NUM_REF_OBS, LATENT_CHANNELS * HORIZON))
    b_phase_lin = jax.random.normal(next(ks), (1, LATENT_CHANNELS * HORIZON), jnp.float32) * 0.01
    wph = w_phase_lin @ dwt_op          # (64, DWT_SIZE)
    bph = b_phase_lin @ dwt_op          # (1, DWT_SIZE)

    return dict(
        wph=wph, bph=bph,
        we1=w((NUM_REF_OBS, ENCODER_HIDDEN[0])), be1=b(ENCODER_HIDDEN[0]),
        we2=w((ENCODER_HIDDEN[0], ENCODER_HIDDEN[1])), be2=b(ENCODER_HIDDEN[1]),
        we3=w((ENCODER_HIDDEN[1], ENCODER_HIDDEN[2])), be3=b(ENCODER_HIDDEN[2]),
        w1a=w((DWT_SIZE, HIDDEN_DIMS[0])),
        w1b=w((ENCODER_HIDDEN[2], HIDDEN_DIMS[0])),
        w1c=w((16, HIDDEN_DIMS[0])),
        w1d=w((NUM_STATE_OBS, HIDDEN_DIMS[0])),
        b1=b(HIDDEN_DIMS[0]),
        w2=w((HIDDEN_DIMS[0], HIDDEN_DIMS[1])), b2=b(HIDDEN_DIMS[1]),
        w3=w((HIDDEN_DIMS[1], NUM_ACTIONS)), b3=b(NUM_ACTIONS),
    )


def fold_params(p):
    """Exact offline linear folds; biases go into the ONE_LANE row (constant-1 lane trick)."""
    h0 = HIDDEN_DIMS[0]
    # all x-consuming layer-1 branches merged into one (NUM_OBS, 32) matrix
    w1x = jnp.zeros((NUM_OBS, h0), jnp.float32)
    w1x = w1x.at[:NUM_REF_OBS, :].set(p["wph"] @ p["w1a"])          # wavelet/phase path
    w1x = w1x.at[NUM_REF_OBS - 16:NUM_REF_OBS, :].add(p["w1c"])     # last_ref path
    w1x = w1x.at[NUM_REF_OBS:, :].set(p["w1d"])                     # state-obs path
    we3w1b = p["we3"] @ p["w1b"]                                    # encoder mean head fold
    b1f = p["b1"] + p["bph"] @ p["w1a"] + p["be3"] @ p["w1b"]       # fused layer-1 bias

    def block(w, bias=None, carry_one=False):
        m = jnp.zeros((PAD, PAD), jnp.float32)
        m = m.at[:w.shape[0], :w.shape[1]].set(w)
        if bias is not None:
            bb = bias.reshape(-1)
            m = m.at[ONE_LANE, :bb.shape[0]].set(bb)                # bias row hit by the ones lane
        if carry_one:
            m = m.at[ONE_LANE, ONE_LANE].set(1.0)                   # propagate the ones lane (elu(1)=1)
        return m

    blocks = [
        block(w1x, b1f, carry_one=True),              # 0: x -> h1 contribution (+b1 fused)
        block(p["we1"], p["be1"], carry_one=True),    # 1: x -> encoder layer 1 (ref_obs lanes only)
        block(p["we2"], p["be2"], carry_one=True),    # 2: e1 -> e2
        block(we3w1b),                                # 3: e2 -> h1 contribution (bias already in 0)
        block(p["w2"], p["b2"], carry_one=True),      # 4: h1 -> h2
        block(p["w3"], p["b3"]),                      # 5: h2 -> actions
    ]
    return jnp.concatenate(blocks, axis=1)            # (PAD, 6*PAD) f32


# ------------------------------- JAX references -------------------------------
def reference_unfolded(x, p):
    """Original (unfolded) module structure, f32."""
    x = jnp.where(jnp.isfinite(x), x, 1e5)
    ref_obs, obs = x[:, :NUM_REF_OBS], x[:, NUM_REF_OBS:]
    last_ref = ref_obs[:, -16:]
    elu = lambda v: jnp.where(v > 0, v, jnp.exp(v) - 1.0)
    periodic = ref_obs @ p["wph"] + p["bph"]
    h = elu(ref_obs @ p["we1"] + p["be1"])
    h = elu(h @ p["we2"] + p["be2"])
    enc = h @ p["we3"] + p["be3"]
    h1 = elu(periodic @ p["w1a"] + enc @ p["w1b"] + last_ref @ p["w1c"] + obs @ p["w1d"] + p["b1"])
    h2 = elu(h1 @ p["w2"] + p["b2"])
    return h2 @ p["w3"] + p["b3"]


def reference_folded(x, w_slab_f32, mxu_dtype):
    """Pure-JAX mirror of the kernel's folded/padded math (same dtype path as the kernel)."""
    xs = jnp.where(jnp.isfinite(x), x, jnp.float32(1e5))
    xp = jnp.zeros((x.shape[0], PAD), jnp.float32)
    xp = xp.at[:, :NUM_OBS].set(xs)
    xp = xp.at[:, ONE_LANE].set(1.0)
    xb = xp.astype(mxu_dtype)
    w = w_slab_f32.astype(mxu_dtype)
    dot = lambda a, b: jnp.dot(a, b, preferred_element_type=jnp.float32)

    def elu(v):
        v = v.astype(mxu_dtype)
        return jnp.where(v > 0, v, jnp.exp(v) - 1.0)

    xw = dot(xb, w[:, :2 * PAD])
    e1 = elu(xw[:, PAD:])
    e2 = elu(dot(e1, w[:, 2 * PAD:3 * PAD]))
    h1 = elu(xw[:, :PAD] + dot(e2, w[:, 3 * PAD:4 * PAD]))
    h2 = elu(dot(h1, w[:, 4 * PAD:5 * PAD]))
    return dot(h2, w[:, 5 * PAD:])[:, :NUM_ACTIONS]


# ---------------------------------- main --------------------------------------
if __name__ == "__main__":
    key = jax.random.PRNGKey(0)
    kx, kc, kp = jax.random.split(key, 3)
    raw = init_raw_params(kp)
    w_slab_f32 = fold_params(raw)
    w_slab = w_slab_f32.astype(jnp.bfloat16)          # bf16 MXU operands

    BATCH = 300   # small; exercises batch padding (-> 512 rows, 2 "parallel" grid steps)
    x = jax.random.normal(kx, (BATCH, NUM_OBS), jnp.float32)
    # exercise the NaN/Inf sanitization path
    x = x.at[0, NUM_OBS - 1].set(jnp.nan)
    x = x.at[1, NUM_REF_OBS + 2].set(jnp.inf)
    x = x.at[2, 5].set(-jnp.inf)

    fwd = jax.jit(imitation_forward)
    out = jax.block_until_ready(fwd(x, w_slab))
    assert out.shape == (BATCH, NUM_ACTIONS)

    # (1) offline folds (incl. the ones-lane bias fold) are exact: f32 folded vs unfolded
    x_clean = jax.random.normal(kc, (64, NUM_OBS), jnp.float32)
    np.testing.assert_allclose(
        np.asarray(reference_folded(x_clean, w_slab_f32, jnp.float32)),
        np.asarray(reference_unfolded(x_clean, raw)),
        rtol=1e-3, atol=1e-3)

    # (2) the Pallas kernel matches the same-math JAX mirror (bf16 MXU + bf16 ELU, f32 accum)
    ref = jax.block_until_ready(reference_folded(x, w_slab_f32, jnp.bfloat16))
    np.testing.assert_allclose(np.asarray(out), np.asarray(ref), rtol=2e-2, atol=2e-2)

    print("KERNEL_OK")
</pallas_src>

<mosaic_0001>
module attributes {stable_mosaic.version = 11 : i64} {
  func.func @imitation_kernel(%arg0: i32, %arg1: memref<256x128xbf16, #tpu.memory_space<vmem>>, %arg2: memref<128x768xbf16, #tpu.memory_space<vmem>>, %arg3: memref<256x128xf32, #tpu.memory_space<vmem>>) attributes {dimension_semantics = [#tpu.dimension_semantics<parallel>], iteration_bounds = array<i64: 2>, scalar_prefetch = 0 : i64, scratch_operands = 0 : i64, tpu.core_type = #tpu.core_type<tc>, window_params = [{transform_indices = @transform_0, window_bounds = array<i64: 256, 128>}, {pipeline_mode = #tpu.pipeline_mode<synchronous>, transform_indices = @transform_1, window_bounds = array<i64: 128, 768>}, {transform_indices = @transform_2, window_bounds = array<i64: 256, 128>}]} {
    %c0 = arith.constant 0 : index
    %c0_0 = arith.constant 0 : index
    %0 = vector.load %arg1[%c0, %c0_0] : memref<256x128xbf16, #tpu.memory_space<vmem>>, vector<256x128xbf16>
    %c0_1 = arith.constant 0 : index
    %c0_2 = arith.constant 0 : index
    %1 = vector.load %arg2[%c0_1, %c0_2] : memref<128x768xbf16, #tpu.memory_space<vmem>>, vector<128x256xbf16>
    %cst = arith.constant dense<0.000000e+00> : vector<256x256xf32>
    %2 = tpu.matmul %0, %1, %cst {dimension_numbers = #tpu.dot_dimension_numbers<[1], [0], [0], [1], [0, 0, 1, 1], [], []>} : vector<256x128xbf16>, vector<128x256xbf16>, vector<256x256xf32> -> vector<256x256xf32>
    %3 = vector.extract_strided_slice %2 {offsets = [0, 128], sizes = [256, 128], strides = [1, 1]} : vector<256x256xf32> to vector<256x128xf32>
    %4 = arith.truncf %3 : vector<256x128xf32> to vector<256x128xbf16>
    %cst_3 = arith.constant 0.000000e+00 : bf16
    %5 = vector.broadcast %cst_3 : bf16 to vector<256x128xbf16>
    %6 = arith.cmpf ogt, %4, %5 : vector<256x128xbf16>
    %7 = math.exp %4 : vector<256x128xbf16>
    %cst_4 = arith.constant 1.000000e+00 : bf16
    %8 = vector.broadcast %cst_4 : bf16 to vector<256x128xbf16>
    %9 = arith.subf %7, %8 : vector<256x128xbf16>
    %10 = arith.select %6, %4, %9 : vector<256x128xi1>, vector<256x128xbf16>
    %c0_5 = arith.constant 0 : index
    %c256 = arith.constant 256 : index
    %11 = vector.load %arg2[%c0_5, %c256] : memref<128x768xbf16, #tpu.memory_space<vmem>>, vector<128x128xbf16>
    %cst_6 = arith.constant dense<0.000000e+00> : vector<256x128xf32>
    %12 = tpu.matmul %10, %11, %cst_6 {dimension_numbers = #tpu.dot_dimension_numbers<[1], [0], [0], [1], [0, 0, 1, 1], [], []>} : vector<256x128xbf16>, vector<128x128xbf16>, vector<256x128xf32> -> vector<256x128xf32>
    %13 = arith.truncf %12 : vector<256x128xf32> to vector<256x128xbf16>
    %cst_7 = arith.constant 0.000000e+00 : bf16
    %14 = vector.broadcast %cst_7 : bf16 to vector<256x128xbf16>
    %15 = arith.cmpf ogt, %13, %14 : vector<256x128xbf16>
    %16 = math.exp %13 : vector<256x128xbf16>
    %cst_8 = arith.constant 1.000000e+00 : bf16
    %17 = vector.broadcast %cst_8 : bf16 to vector<256x128xbf16>
    %18 = arith.subf %16, %17 : vector<256x128xbf16>
    %19 = arith.select %15, %13, %18 : vector<256x128xi1>, vector<256x128xbf16>
    %20 = vector.extract_strided_slice %2 {offsets = [0, 0], sizes = [256, 128], strides = [1, 1]} : vector<256x256xf32> to vector<256x128xf32>
    %c0_9 = arith.constant 0 : index
    %c384 = arith.constant 384 : index
    %21 = vector.load %arg2[%c0_9, %c384] : memref<128x768xbf16, #tpu.memory_space<vmem>>, vector<128x128xbf16>
    %cst_10 = arith.constant dense<0.000000e+00> : vector<256x128xf32>
    %22 = tpu.matmul %19, %21, %cst_10 {dimension_numbers = #tpu.dot_dimension_numbers<[1], [0], [0], [1], [0, 0, 1, 1], [], []>} : vector<256x128xbf16>, vector<128x128xbf16>, vector<256x128xf32> -> vector<256x128xf32>
    %23 = arith.addf %20, %22 : vector<256x128xf32>
    %24 = arith.truncf %23 : vector<256x128xf32> to vector<256x128xbf16>
    %cst_11 = arith.constant 0.000000e+00 : bf16
    %25 = vector.broadcast %cst_11 : bf16 to vector<256x128xbf16>
    %26 = arith.cmpf ogt, %24, %25 : vector<256x128xbf16>
    %27 = math.exp %24 : vector<256x128xbf16>
    %cst_12 = arith.constant 1.000000e+00 : bf16
    %28 = vector.broadcast %cst_12 : bf16 to vector<256x128xbf16>
    %29 = arith.subf %27, %28 : vector<256x128xbf16>
    %30 = arith.select %26, %24, %29 : vector<256x128xi1>, vector<256x128xbf16>
    %c0_13 = arith.constant 0 : index
    %c512 = arith.constant 512 : index
    %31 = vector.load %arg2[%c0_13, %c512] : memref<128x768xbf16, #tpu.memory_space<vmem>>, vector<128x128xbf16>
    %cst_14 = arith.constant dense<0.000000e+00> : vector<256x128xf32>
    %32 = tpu.matmul %30, %31, %cst_14 {dimension_numbers = #tpu.dot_dimension_numbers<[1], [0], [0], [1], [0, 0, 1, 1], [], []>} : vector<256x128xbf16>, vector<128x128xbf16>, vector<256x128xf32> -> vector<256x128xf32>
    %33 = arith.truncf %32 : vector<256x128xf32> to vector<256x128xbf16>
    %cst_15 = arith.constant 0.000000e+00 : bf16
    %34 = vector.broadcast %cst_15 : bf16 to vector<256x128xbf16>
    %35 = arith.cmpf ogt, %33, %34 : vector<256x128xbf16>
    %36 = math.exp %33 : vector<256x128xbf16>
    %cst_16 = arith.constant 1.000000e+00 : bf16
    %37 = vector.broadcast %cst_16 : bf16 to vector<256x128xbf16>
    %38 = arith.subf %36, %37 : vector<256x128xbf16>
    %39 = arith.select %35, %33, %38 : vector<256x128xi1>, vector<256x128xbf16>
    %c0_17 = arith.constant 0 : index
    %c640 = arith.constant 640 : index
    %40 = vector.load %arg2[%c0_17, %c640] : memref<128x768xbf16, #tpu.memory_space<vmem>>, vector<128x128xbf16>
    %cst_18 = arith.constant dense<0.000000e+00> : vector<256x128xf32>
    %41 = tpu.matmul %39, %40, %cst_18 {dimension_numbers = #tpu.dot_dimension_numbers<[1], [0], [0], [1], [0, 0, 1, 1], [], []>} : vector<256x128xbf16>, vector<128x128xbf16>, vector<256x128xf32> -> vector<256x128xf32>
    %c0_19 = arith.constant 0 : index
    %c0_20 = arith.constant 0 : index
    %42 = vector.load %arg3[%c0_19, %c0_20] : memref<256x128xf32, #tpu.memory_space<vmem>>, vector<256x128xf32>
    tpu.vector_store %arg3[%c0_19, %c0_20], %41 {strides = array<i32>} : memref<256x128xf32, #tpu.memory_space<vmem>>, vector<256x128xf32>,
    return
  }
  func.func @transform_0(%arg0: i32) -> (i32, i32) {
    %c0_i32 = arith.constant 0 : i32
    %c0_i32_0 = arith.constant 0 : i32
    return %arg0, %c0_i32 : i32, i32
  }
  func.func @transform_1(%arg0: i32) -> (i32, i32) {
    %c0_i32 = arith.constant 0 : i32
    %c0_i32_0 = arith.constant 0 : i32
    %c0_i32_1 = arith.constant 0 : i32
    return %c0_i32, %c0_i32_0 : i32, i32
  }
  func.func @transform_2(%arg0: i32) -> (i32, i32) {
    %c0_i32 = arith.constant 0 : i32
    %c0_i32_0 = arith.constant 0 : i32
    return %arg0, %c0_i32 : i32, i32
  }
}

</mosaic_0001>

<llo_original>
// kernel: imitation_forward.1
$region0: #{imitation_forward.1}
  #allocation0 [shape = 'u32[]', space=smem, size = 0x4, offset = 0x4, fixed_abs, tag = 'smem constant byte address 0x4 - core index']
  #allocation1 [shape = 'u32[144,128]{1,0:T(1,128)}', space=vmem, size = 0x12000, scoped, tag = 'internal scratch']
  %s0 = inlined_call_operand.vmem [shape: bf16[512,128], index: 0, kind: input, shape index: {}]
  %s1 = inlined_call_operand.vmem [shape: bf16[128,768], index: 1, kind: input, shape index: {}]
  %s2 = inlined_call_operand.vmem [shape: f32[512,128], index: 2, kind: output, shape index: {}]
  %s3 = sld [smem:[#allocation0]]
  $region41: #{imitation_forward.1} parent=0
    _
  %s5 = ssub.s32 1, %s3
  %s6 = scalar_select 0, %s5, %s3
  loop: start=0, step=1, limit=4
  $region2: #{imitation_forward.1} parent=0 // loop_pre_header
    _
  $region3: #{imitation_forward.1} parent=0 // loop_header
    %s8 = sphi 0, %s12
    %p9 = scmp.ge.s32.totalorder %s8, 4
    %s18 = sphi 0, %s20
    %s21 = sphi 0, %s18
    %s22 = sphi 0, %s21
    %s38 = sphi 0, %s22
    %s42 = sphi 0, %s42
    %s44 = sphi 0, %s42
    %s45 = sphi 0, %s44
    %s59 = sphi 0, %s45
    %s65 = sphi 0, %s67
    %s68 = sphi 0, %s65
    %s69 = sphi 0, %s68
    %s85 = sphi 0, %s69
  $region4: #{imitation_forward.1} parent=0 // loop_header_branch
    %11 = sbr.rel (%p9) target = $region8
  $region5: #{imitation_forward.1} parent=0 // loop_body
    %s13 = ssub.s32 %s8, 1
    %s14 = ssub.s32 %s8, 2
    %s15 = sadd.s32 %s8, 1
    %s16 = ssub.s32 %s8, %s15
    %p17 = scmp.eq.s32.totalorder %s16, 0
    %s19 = sadd.s32 %s18, 1
    %s20 = scalar_select %p17, %s18, %s19
    %p23 = pneg %p17
    %p24 = scmp.eq.s32.totalorder %s8, 1
    %p25 = por %p23, %p24
    %p26 = scmp.ne.s32.totalorder %s18, %s21
    %p27 = scmp.eq.s32.totalorder %s8, 0
    %p28 = por %p26, %p27
    %p29 = scmp.ne.s32.totalorder %s18, %s21
    %p30 = scmp.eq.s32.totalorder %s13, 1
    %p31 = por %p29, %p30
    %p32 = scmp.ne.s32.totalorder %s21, %s22
    %p33 = scmp.eq.s32.totalorder %s13, 0
    %p34 = por %p32, %p33
    %p35 = scmp.ne.s32.totalorder %s21, %s22
    %p36 = scmp.eq.s32.totalorder %s14, 1
    %p37 = por %p35, %p36
    %p39 = scmp.ne.s32.totalorder %s22, %s38
    %p40 = scmp.eq.s32.totalorder %s14, 0
    %p41 = por %p39, %p40
    %s43 = sadd.s32 %s42, 1
    %p46 = scmp.eq.s32.totalorder %s8, 1
    %p47 = scmp.ne.s32.totalorder %s42, %s44
    %p48 = scmp.eq.s32.totalorder %s8, 0
    %p49 = por %p47, %p48
    %p50 = scmp.ne.s32.totalorder %s42, %s44
    %p51 = scmp.eq.s32.totalorder %s13, 1
    %p52 = por %p50, %p51
    %p53 = scmp.ne.s32.totalorder %s44, %s45
    %p54 = scmp.eq.s32.totalorder %s13, 0
    %p55 = por %p53, %p54
    %p56 = scmp.ne.s32.totalorder %s44, %s45
    %p57 = scmp.eq.s32.totalorder %s14, 1
    %p58 = por %p56, %p57
    %p60 = scmp.ne.s32.totalorder %s45, %s59
    %p61 = scmp.eq.s32.totalorder %s14, 0
    %p62 = por %p60, %p61
    %s63 = ssub.s32 %s8, %s15
    %p64 = scmp.eq.s32.totalorder %s63, 0
    %s66 = sadd.s32 %s65, 1
    %s67 = scalar_select %p64, %s65, %s66
    %p70 = pneg %p64
    %p71 = scmp.eq.s32.totalorder %s8, 1
    %p72 = por %p70, %p71
    %p73 = scmp.ne.s32.totalorder %s65, %s68
    %p74 = scmp.eq.s32.totalorder %s8, 0
    %p75 = por %p73, %p74
    %p76 = scmp.ne.s32.totalorder %s65, %s68
    %p77 = scmp.eq.s32.totalorder %s13, 1
    %p78 = por %p76, %p77
    %p79 = scmp.ne.s32.totalorder %s68, %s69
    %p80 = scmp.eq.s32.totalorder %s13, 0
    %p81 = por %p79, %p80
    %p82 = scmp.ne.s32.totalorder %s68, %s69
    %p83 = scmp.eq.s32.totalorder %s14, 1
    %p84 = por %p82, %p83
    %p86 = scmp.ne.s32.totalorder %s69, %s85
    %p87 = scmp.eq.s32.totalorder %s14, 0
    %p88 = por %p86, %p87
    %p89 = scmp.le.s32.totalorder 1, %s8
    %p90 = scmp.lt.s32.totalorder %s8, 3
    %p91 = pnand %p89, %p90
    %p92 = pneg %p91
    // Predicated region
    $region9: #{imitation_forward.1} parent=5 // pred_check
      _
    $region10: #{imitation_forward.1} parent=5 // pred_check_branch
      %94 = sbr.rel (%p91) target = $region12
    $region11: #{imitation_forward.1} parent=5 // pred_region
      %s95 = ssub.s32 %s8, 1
      // Predicated region
      $region13: #{imitation_forward.1} parent=11 // pred_check
        %p96 = pneg %p55
      $region14: #{imitation_forward.1} parent=11 // pred_check_branch
        %98 = sbr.rel (%p96) target = $region16
      $region15: #{imitation_forward.1} parent=11 // pred_region
        _
      $region16: #{imitation_forward.1} parent=11 // pred_fallthru
        _
    $region12: #{imitation_forward.1} parent=5 // pred_fallthru
      _
    %p99 = scmp.lt.s32.totalorder %s8, 2
    // Predicated region
    $region17: #{imitation_forward.1} parent=5 // pred_check
      %p100 = pneg %p99
    $region18: #{imitation_forward.1} parent=5 // pred_check_branch
      %102 = sbr.rel (%p100) target = $region20
    $region19: #{imitation_forward.1} parent=5 // pred_region
      // Predicated region
      $region21: #{imitation_forward.1} parent=19 // pred_check
        %p103 = pneg %p28
      $region22: #{imitation_forward.1} parent=19 // pred_check_branch
        %105 = sbr.rel (%p103) target = $region24
      $region23: #{imitation_forward.1} parent=19 // pred_region
        %s106 = smul.u32 32, %s8
        %p107 = scmp.lt.s32.totalorder %s106, 63
        %s108 = scalar_select %p107, %s106, 63
        %s109 = smul.addr %s108, 4
        %s110 = scalar_lea.vmem %s0, %s109
        %s111 = smul.u32 32, %s8
      $region24: #{imitation_forward.1} parent=19 // pred_fallthru
        _
    $region20: #{imitation_forward.1} parent=5 // pred_fallthru
      _
    %p112 = scmp.le.s32.totalorder 1, %s8
    %p113 = scmp.lt.s32.totalorder %s8, 3
    %p114 = pnand %p112, %p113
    %p115 = pneg %p114
    // Predicated region
    $region25: #{imitation_forward.1} parent=5 // pred_check
      _
    $region26: #{imitation_forward.1} parent=5 // pred_check_branch
      %117 = sbr.rel (%p114) target = $region28
    $region27: #{imitation_forward.1} parent=5 // pred_region
      %s118 = ssub.s32 %s8, 1
      %s119 = smul.u32 32, %s13
      %p120 = scmp.lt.s32.totalorder %s119, 63
      %s121 = scalar_select %p120, %s119, 63
      %s122 = smul.addr %s121, 4
      %s123 = scalar_lea.vmem %s0, %s122
      %p124 = pneg %p34
      %p125 = pneg %p31
      %p126 = pneg %p55
      %p127 = pneg %p52
      %p128 = pneg %p81
      %p129 = pneg %p78
      %s130 = smul.u32 32, %s13
      %p131 = scmp.lt.s32.totalorder %s130, 63
      %s132 = scalar_select %p131, %s130, 63
      %s133 = smul.addr %s132, 8
      %s134 = scalar_lea.vmem %s2, %s133
      %s135 = smul.u32 32, %s13
      %p136 = scmp.lt.s32.totalorder %s135, 63
      %s137 = scalar_select %p136, %s135, 63
      %s138 = smul.addr %s137, 4
      %s139 = scalar_lea.vmem %s0, %s138
      %s140 = smul.u32 32, %s13
      %s141 = smul.u32 32, %s13
      %p142 = scmp.lt.s32.totalorder %s141, 63
      %s143 = scalar_select %p142, %s141, 63
      %s144 = smul.addr %s143, 8
      %s145 = scalar_lea.vmem %s2, %s144
      %s146 = smul.u32 32, %s13
      %v149 = vld [vmem:[%s139] sm:$0xf]
      %v150 = vld [vmem:[%s139 + $0x4] sm:$0xf]
      %v151 = vld [vmem:[%s139 + $0x8] sm:$0xf]
      %v152 = vld [vmem:[%s139 + $0xc] sm:$0xf]
      %v153 = vld [vmem:[%s139 + $0x10] sm:$0xf]
      %v154 = vld [vmem:[%s139 + $0x14] sm:$0xf]
      %v155 = vld [vmem:[%s139 + $0x18] sm:$0xf]
      %v156 = vld [vmem:[%s139 + $0x1c] sm:$0xf]
      %v157 = vld [vmem:[%s139 + $0x20] sm:$0xf]
      %v158 = vld [vmem:[%s139 + $0x24] sm:$0xf]
      %v159 = vld [vmem:[%s139 + $0x28] sm:$0xf]
      %v160 = vld [vmem:[%s139 + $0x2c] sm:$0xf]
      %v161 = vld [vmem:[%s139 + $0x30] sm:$0xf]
      %v162 = vld [vmem:[%s139 + $0x34] sm:$0xf]
      %v163 = vld [vmem:[%s139 + $0x38] sm:$0xf]
      %v164 = vld [vmem:[%s139 + $0x3c] sm:$0xf]
      %v165 = vld [vmem:[%s139 + $0x40] sm:$0xf]
      %v166 = vld [vmem:[%s139 + $0x44] sm:$0xf]
      %v167 = vld [vmem:[%s139 + $0x48] sm:$0xf]
      %v168 = vld [vmem:[%s139 + $0x4c] sm:$0xf]
      %v169 = vld [vmem:[%s139 + $0x50] sm:$0xf]
      %v170 = vld [vmem:[%s139 + $0x54] sm:$0xf]
      %v171 = vld [vmem:[%s139 + $0x58] sm:$0xf]
      %v172 = vld [vmem:[%s139 + $0x5c] sm:$0xf]
      %v173 = vld [vmem:[%s139 + $0x60] sm:$0xf]
      %v174 = vld [vmem:[%s139 + $0x64] sm:$0xf]
      %v175 = vld [vmem:[%s139 + $0x68] sm:$0xf]
      %v176 = vld [vmem:[%s139 + $0x6c] sm:$0xf]
      %v177 = vld [vmem:[%s139 + $0x70] sm:$0xf]
      %v178 = vld [vmem:[%s139 + $0x74] sm:$0xf]
      %v179 = vld [vmem:[%s139 + $0x78] sm:$0xf]
      %v180 = vld [vmem:[%s139 + $0x7c] sm:$0xf]
      %v181 = vld [vmem:[%s1] sm:$0xff]
      %v182 = vld [vmem:[%s1 + $0x18] sm:$0xff]
      %v183 = vld [vmem:[%s1 + $0x30] sm:$0xff]
      %v184 = vld [vmem:[%s1 + $0x48] sm:$0xff]
      %v185 = vld [vmem:[%s1 + $0x60] sm:$0xff]
      %v186 = vld [vmem:[%s1 + $0x78] sm:$0xff]
      %v187 = vld [vmem:[%s1 + $0x90] sm:$0xff]
      %v188 = vld [vmem:[%s1 + $0xa8] sm:$0xff]
      %v189 = vld [vmem:[%s1 + $0xc0] sm:$0xff]
      %v190 = vld [vmem:[%s1 + $0xd8] sm:$0xff]
      %v191 = vld [vmem:[%s1 + $0xf0] sm:$0xff]
      %v192 = vld [vmem:[%s1 + $0x108] sm:$0xff]
      %v193 = vld [vmem:[%s1 + $0x120] sm:$0xff]
      %v194 = vld [vmem:[%s1 + $0x138] sm:$0xff]
      %v195 = vld [vmem:[%s1 + $0x150] sm:$0xff]
      %v196 = vld [vmem:[%s1 + $0x168] sm:$0xff]
      %v229 = vunpack.c.l.b16 %v149
      %v230 = vunpack.c.l.b16 %v150
      %v231 = vunpack.c.l.b16 %v151
      %v232 = vunpack.c.l.b16 %v152
      %v233 = vunpack.c.l.b16 %v153
      %v234 = vunpack.c.l.b16 %v154
      %v235 = vunpack.c.l.b16 %v155
      %v236 = vunpack.c.l.b16 %v156
      %v237 = vunpack.c.l.b16 %v157
      %v238 = vunpack.c.l.b16 %v158
      %v239 = vunpack.c.l.b16 %v159
      %v240 = vunpack.c.l.b16 %v160
      %v241 = vunpack.c.l.b16 %v161
      %v242 = vunpack.c.l.b16 %v162
      %v243 = vunpack.c.l.b16 %v163
      %v244 = vunpack.c.l.b16 %v164
      %v245 = vunpack.c.l.b16 %v165
      %v246 = vunpack.c.l.b16 %v166
      %v247 = vunpack.c.l.b16 %v167
      %v248 = vunpack.c.l.b16 %v168
      %v249 = vunpack.c.l.b16 %v169
      %v250 = vunpack.c.l.b16 %v170
      %v251 = vunpack.c.l.b16 %v171
      %v252 = vunpack.c.l.b16 %v172
      %v253 = vunpack.c.l.b16 %v173
      %v254 = vunpack.c.l.b16 %v174
      %v255 = vunpack.c.l.b16 %v175
      %v256 = vunpack.c.l.b16 %v176
      %v257 = vunpack.c.l.b16 %v177
      %v258 = vunpack.c.l.b16 %v178
      %v259 = vunpack.c.l.b16 %v179
      %v260 = vunpack.c.l.b16 %v180
      %v261 = vpack.c.b16 %v230, %v229
      %v262 = vpack.c.b16 %v232, %v231
      %v263 = vpack.c.b16 %v234, %v233
      %v264 = vpack.c.b16 %v236, %v235
      %v265 = vpack.c.b16 %v238, %v237
      %v266 = vpack.c.b16 %v240, %v239
      %v267 = vpack.c.b16 %v242, %v241
      %v268 = vpack.c.b16 %v244, %v243
      %v269 = vpack.c.b16 %v246, %v245
      %v270 = vpack.c.b16 %v248, %v247
      %v271 = vpack.c.b16 %v250, %v249
      %v272 = vpack.c.b16 %v252, %v251
      %v273 = vpack.c.b16 %v254, %v253
      %v274 = vpack.c.b16 %v256, %v255
      %v275 = vpack.c.b16 %v258, %v257
      %v276 = vpack.c.b16 %v260, %v259
      %v309 = vunpack.c.l.b16 %v181
      %v310 = vunpack.c.h.b16 %v181
      %v311 = vunpack.c.l.b16 %v182
      %v312 = vunpack.c.h.b16 %v182
      %v313 = vunpack.c.l.b16 %v183
      %v314 = vunpack.c.h.b16 %v183
      %v315 = vunpack.c.l.b16 %v184
      %v316 = vunpack.c.h.b16 %v184
      %v317 = vunpack.c.l.b16 %v185
      %v318 = vunpack.c.h.b16 %v185
      %v319 = vunpack.c.l.b16 %v186
      %v320 = vunpack.c.h.b16 %v186
      %v321 = vunpack.c.l.b16 %v187
      %v322 = vunpack.c.h.b16 %v187
      %v323 = vunpack.c.l.b16 %v188
      %v324 = vunpack.c.h.b16 %v188
      %v325 = vunpack.c.l.b16 %v189
      %v326 = vunpack.c.h.b16 %v189
      %v327 = vunpack.c.l.b16 %v190
      %v328 = vunpack.c.h.b16 %v190
      %v329 = vunpack.c.l.b16 %v191
      %v330 = vunpack.c.h.b16 %v191
      %v331 = vunpack.c.l.b16 %v192
      %v332 = vunpack.c.h.b16 %v192
      %v333 = vunpack.c.l.b16 %v193
      %v334 = vunpack.c.h.b16 %v193
      %v335 = vunpack.c.l.b16 %v194
      %v336 = vunpack.c.h.b16 %v194
      %v337 = vunpack.c.l.b16 %v195
      %v338 = vunpack.c.h.b16 %v195
      %v339 = vunpack.c.l.b16 %v196
      %v340 = vunpack.c.h.b16 %v196
      %v341 = vpack.c.b16 %v311, %v309
      %v342 = vpack.c.b16 %v312, %v310
      %v343 = vpack.c.b16 %v315, %v313
      %v344 = vpack.c.b16 %v316, %v314
      %v345 = vpack.c.b16 %v319, %v317
      %v346 = vpack.c.b16 %v320, %v318
      %v347 = vpack.c.b16 %v323, %v321
      %v348 = vpack.c.b16 %v324, %v322
      %v349 = vpack.c.b16 %v327, %v325
      %v350 = vpack.c.b16 %v328, %v326
      %v351 = vpack.c.b16 %v331, %v329
      %v352 = vpack.c.b16 %v332, %v330
      %v353 = vpack.c.b16 %v335, %v333
      %v354 = vpack.c.b16 %v336, %v334
      %v355 = vpack.c.b16 %v339, %v337
      %v356 = vpack.c.b16 %v340, %v338
      %373 = vmatprep.subr.bf16.mxu0 %v342
      %374 = vmatpush1.bf16.msra.mxu0 %v341
      %375 = vmatprep.subr.bf16.mxu0 %v344
      %376 = vmatpush1.bf16.msra.mxu0 %v343
      %377 = vmatprep.subr.bf16.mxu0 %v346
      %378 = vmatpush1.bf16.msra.mxu0 %v345
      %379 = vmatprep.subr.bf16.mxu0 %v348
      %380 = vmatpush1.bf16.msra.mxu0 %v347
      %381 = vmatprep.subr.bf16.mxu0 %v350
      %382 = vmatpush1.bf16.msra.mxu0 %v349
      %383 = vmatprep.subr.bf16.mxu0 %v352
      %384 = vmatpush1.bf16.msra.mxu0 %v351
      %385 = vmatprep.subr.bf16.mxu0 %v354
      %386 = vmatpush1.bf16.msra.mxu0 %v353
      %387 = vmatprep.subr.bf16.mxu0 %v356
      %388 = vmatpush1.bf16.msra.mxu0 %v355
      %389 = vmatprep.subr.bf16.mxu0 0
      %390 = vmatpush1.bf16.msra.mxu0 0
      %391 = vmatprep.subr.bf16.mxu0 0
      %392 = vmatpush1.bf16.msra.mxu0 0
      %393 = vmatprep.subr.bf16.mxu0 0
      %394 = vmatpush1.bf16.msra.mxu0 0
      %395 = vmatprep.subr.bf16.mxu0 0
      %396 = vmatpush1.bf16.msra.mxu0 0
      %397 = vmatprep.subr.bf16.mxu0 0
      %398 = vmatpush1.bf16.msra.mxu0 0
      %399 = vmatprep.subr.bf16.mxu0 0
      %400 = vmatpush1.bf16.msra.mxu0 0
      %401 = vmatprep.subr.bf16.mxu0 0
      %402 = vmatpush1.bf16.msra.mxu0 0
      %403 = vmatprep.subr.bf16.mxu0 0
      %404 = vmatpush1.bf16.msra.mxu0 0
      %405 = vmatprep.mubr.bf16.mxu0 0
      %406 = vmatmul.mubr.bf16.gmra.mrb[0].mxu0 %v261
      %v407 = vpop.f32.mrb[0].mxu0
      %v408 = vadd.f32 0.0, %v407
      %v409 = vpop.f32.mrb[0].mxu0
      %v410 = vadd.f32 0.0, %v409
      %v411 = vpop.f32.mrb[0].mxu0
      %v412 = vadd.f32 0.0, %v411
      %v413 = vpop.f32.mrb[0].mxu0
      %v414 = vadd.f32 0.0, %v413
      %415 = vmatprep.mubr.bf16.mxu0 0
      %416 = vmatmul.mubr.bf16.gmra.mrb[0].mxu0 %v262
      %v417 = vpop.f32.mrb[0].mxu0
      %v418 = vadd.f32 0.0, %v417
      %v419 = vpop.f32.mrb[0].mxu0
      %v420 = vadd.f32 0.0, %v419
      %v421 = vpop.f32.mrb[0].mxu0
      %v422 = vadd.f32 0.0, %v421
      %v423 = vpop.f32.mrb[0].mxu0
      %v424 = vadd.f32 0.0, %v423
      %425 = vmatprep.mubr.bf16.mxu0 0
      %426 = vmatmul.mubr.bf16.gmra.mrb[0].mxu0 %v263
      %v427 = vpop.f32.mrb[0].mxu0
      %v428 = vadd.f32 0.0, %v427
      %v429 = vpop.f32.mrb[0].mxu0
      %v430 = vadd.f32 0.0, %v429
      %v431 = vpop.f32.mrb[0].mxu0
      %v432 = vadd.f32 0.0, %v431
      %v433 = vpop.f32.mrb[0].mxu0
      %v434 = vadd.f32 0.0, %v433
      %435 = vmatprep.mubr.bf16.mxu0 0
      %436 = vmatmul.mubr.bf16.gmra.mrb[0].mxu0 %v264
      %v437 = vpop.f32.mrb[0].mxu0
      %v438 = vadd.f32 0.0, %v437
      %v439 = vpop.f32.mrb[0].mxu0
      %v440 = vadd.f32 0.0, %v439
      %v441 = vpop.f32.mrb[0].mxu0
      %v442 = vadd.f32 0.0, %v441
      %v443 = vpop.f32.mrb[0].mxu0
      %v444 = vadd.f32 0.0, %v443
      %445 = vmatprep.mubr.bf16.mxu0 0
      %446 = vmatmul.mubr.bf16.gmra.mrb[0].mxu0 %v265
      %v447 = vpop.f32.mrb[0].mxu0
      %v448 = vadd.f32 0.0, %v447
      %v449 = vpop.f32.mrb[0].mxu0
      %v450 = vadd.f32 0.0, %v449
      %v451 = vpop.f32.mrb[0].mxu0
      %v452 = vadd.f32 0.0, %v451
      %v453 = vpop.f32.mrb[0].mxu0
      %v454 = vadd.f32 0.0, %v453
      %455 = vmatprep.mubr.bf16.mxu0 0
      %456 = vmatmul.mubr.bf16.gmra.mrb[0].mxu0 %v266
      %v457 = vpop.f32.mrb[0].mxu0
      %v458 = vadd.f32 0.0, %v457
      %v459 = vpop.f32.mrb[0].mxu0
      %v460 = vadd.f32 0.0, %v459
      %v461 = vpop.f32.mrb[0].mxu0
      %v462 = vadd.f32 0.0, %v461
      %v463 = vpop.f32.mrb[0].mxu0
      %v464 = vadd.f32 0.0, %v463
      %465 = vmatprep.mubr.bf16.mxu0 0
      %466 = vmatmul.mubr.bf16.gmra.mrb[0].mxu0 %v267
      %v467 = vpop.f32.mrb[0].mxu0
      %v468 = vadd.f32 0.0, %v467
      %v469 = vpop.f32.mrb[0].mxu0
      %v470 = vadd.f32 0.0, %v469
      %v471 = vpop.f32.mrb[0].mxu0
      %v472 = vadd.f32 0.0, %v471
      %v473 = vpop.f32.mrb[0].mxu0
      %v474 = vadd.f32 0.0, %v473
      %475 = vmatprep.mubr.bf16.mxu0 0
      %476 = vmatmul.mubr.bf16.gmra.mrb[0].mxu0 %v268
      %v477 = vpop.f32.mrb[0].mxu0
      %v478 = vadd.f32 0.0, %v477
      %v479 = vpop.f32.mrb[0].mxu0
      %v480 = vadd.f32 0.0, %v479
      %v481 = vpop.f32.mrb[0].mxu0
      %v482 = vadd.f32 0.0, %v481
      %v483 = vpop.f32.mrb[0].mxu0
      %v484 = vadd.f32 0.0, %v483
      %485 = vmatprep.mubr.bf16.mxu0 0
      %486 = vmatmul.mubr.bf16.gmra.mrb[0].mxu0 %v269
      %v487 = vpop.f32.mrb[0].mxu0
      %v488 = vadd.f32 0.0, %v487
      %v489 = vpop.f32.mrb[0].mxu0
      %v490 = vadd.f32 0.0, %v489
      %v491 = vpop.f32.mrb[0].mxu0
      %v492 = vadd.f32 0.0, %v491
      %v493 = vpop.f32.mrb[0].mxu0
      %v494 = vadd.f32 0.0, %v493
      %495 = vmatprep.mubr.bf16.mxu0 0
      %496 = vmatmul.mubr.bf16.gmra.mrb[0].mxu0 %v270
      %v497 = vpop.f32.mrb[0].mxu0
      %v498 = vadd.f32 0.0, %v497
      %v499 = vpop.f32.mrb[0].mxu0
      %v500 = vadd.f32 0.0, %v499
      %v501 = vpop.f32.mrb[0].mxu0
      %v502 = vadd.f32 0.0, %v501
      %v503 = vpop.f32.mrb[0].mxu0
      %v504 = vadd.f32 0.0, %v503
      %505 = vmatprep.mubr.bf16.mxu0 0
      %506 = vmatmul.mubr.bf16.gmra.mrb[0].mxu0 %v271
      %v507 = vpop.f32.mrb[0].mxu0
      %v508 = vadd.f32 0.0, %v507
      %v509 = vpop.f32.mrb[0].mxu0
      %v510 = vadd.f32 0.0, %v509
      %v511 = vpop.f32.mrb[0].mxu0
      %v512 = vadd.f32 0.0, %v511
      %v513 = vpop.f32.mrb[0].mxu0
      %v514 = vadd.f32 0.0, %v513
      %515 = vmatprep.mubr.bf16.mxu0 0
      %516 = vmatmul.mubr.bf16.gmra.mrb[0].mxu0 %v272
      %v517 = vpop.f32.mrb[0].mxu0
      %v518 = vadd.f32 0.0, %v517
      %v519 = vpop.f32.mrb[0].mxu0
      %v520 = vadd.f32 0.0, %v519
      %v521 = vpop.f32.mrb[0].mxu0
      %v522 = vadd.f32 0.0, %v521
      %v523 = vpop.f32.mrb[0].mxu0
      %v524 = vadd.f32 0.0, %v523
      %525 = vmatprep.mubr.bf16.mxu0 0
      %526 = vmatmul.mubr.bf16.gmra.mrb[0].mxu0 %v273
      %v527 = vpop.f32.mrb[0].mxu0
      %v528 = vadd.f32 0.0, %v527
      %v529 = vpop.f32.mrb[0].mxu0
      %v530 = vadd.f32 0.0, %v529
      %v531 = vpop.f32.mrb[0].mxu0
      %v532 = vadd.f32 0.0, %v531
      %v533 = vpop.f32.mrb[0].mxu0
      %v534 = vadd.f32 0.0, %v533
      %535 = vmatprep.mubr.bf16.mxu0 0
      %536 = vmatmul.mubr.bf16.gmra.mrb[0].mxu0 %v274
      %v537 = vpop.f32.mrb[0].mxu0
      %v538 = vadd.f32 0.0, %v537
      %v539 = vpop.f32.mrb[0].mxu0
      %v540 = vadd.f32 0.0, %v539
      %v541 = vpop.f32.mrb[0].mxu0
      %v542 = vadd.f32 0.0, %v541
      %v543 = vpop.f32.mrb[0].mxu0
      %v544 = vadd.f32 0.0, %v543
      %545 = vmatprep.mubr.bf16.mxu0 0
      %546 = vmatmul.mubr.bf16.gmra.mrb[0].mxu0 %v275
      %v547 = vpop.f32.mrb[0].mxu0
      %v548 = vadd.f32 0.0, %v547
      %v549 = vpop.f32.mrb[0].mxu0
      %v550 = vadd.f32 0.0, %v549
      %v551 = vpop.f32.mrb[0].mxu0
      %v552 = vadd.f32 0.0, %v551
      %v553 = vpop.f32.mrb[0].mxu0
      %v554 = vadd.f32 0.0, %v553
      %555 = vmatprep.mubr.bf16.mxu0 0
      %556 = vmatmul.mubr.bf16.gmra.mrb[0].mxu0 %v276
      %v557 = vpop.f32.mrb[0].mxu0
      %v558 = vadd.f32 0.0, %v557
      %v559 = vpop.f32.mrb[0].mxu0
      %v560 = vadd.f32 0.0, %v559
      %v561 = vpop.f32.mrb[0].mxu0
      %v562 = vadd.f32 0.0, %v561
      %v563 = vpop.f32.mrb[0].mxu0
      %v564 = vadd.f32 0.0, %v563
      %565 = vdwg.mxu0
      %v566 = vpack.c.bf16 %v414, %v410
      %v567 = vpack.c.bf16 %v424, %v420
      %v568 = vpack.c.bf16 %v434, %v430
      %v569 = vpack.c.bf16 %v444, %v440
      %v570 = vpack.c.bf16 %v454, %v450
      %v571 = vpack.c.bf16 %v464, %v460
      %v572 = vpack.c.bf16 %v474, %v470
      %v573 = vpack.c.bf16 %v484, %v480
      %v574 = vpack.c.bf16 %v494, %v490
      %v575 = vpack.c.bf16 %v504, %v500
      %v576 = vpack.c.bf16 %v514, %v510
      %v577 = vpack.c.bf16 %v524, %v520
      %v578 = vpack.c.bf16 %v534, %v530
      %v579 = vpack.c.bf16 %v544, %v540
      %v580 = vpack.c.bf16 %v554, %v550
      %v581 = vpack.c.bf16 %v564, %v560
      %vm582 = vcmp.gt.bf16.partialorder %v566, 0
      %vm583 = vcmp.gt.bf16.partialorder %v567, 0
      %vm584 = vcmp.gt.bf16.partialorder %v568, 0
      %vm585 = vcmp.gt.bf16.partialorder %v569, 0
      %vm586 = vcmp.gt.bf16.partialorder %v570, 0
      %vm587 = vcmp.gt.bf16.partialorder %v571, 0
      %vm588 = vcmp.gt.bf16.partialorder %v572, 0
      %vm589 = vcmp.gt.bf16.partialorder %v573, 0
      %vm590 = vcmp.gt.bf16.partialorder %v574, 0
      %vm591 = vcmp.gt.bf16.partialorder %v575, 0
      %vm592 = vcmp.gt.bf16.partialorder %v576, 0
      %vm593 = vcmp.gt.bf16.partialorder %v577, 0
      %vm594 = vcmp.gt.bf16.partialorder %v578, 0
      %vm595 = vcmp.gt.bf16.partialorder %v579, 0
      %vm596 = vcmp.gt.bf16.partialorder %v580, 0
      %vm597 = vcmp.gt.bf16.partialorder %v581, 0
      %v599 = vmul.bf16 %v566, 1069105081
      %v600 = vpow.bf16.pop %v599
      %v602 = vmul.bf16 %v567, 1069105081
      %v603 = vpow.bf16.pop %v602
      %v605 = vmul.bf16 %v568, 1069105081
      %v606 = vpow.bf16.pop %v605
      %v608 = vmul.bf16 %v569, 1069105081
      %v609 = vpow.bf16.pop %v608
      %v611 = vmul.bf16 %v570, 1069105081
      %v612 = vpow.bf16.pop %v611
      %v614 = vmul.bf16 %v571, 1069105081
      %v615 = vpow.bf16.pop %v614
      %v617 = vmul.bf16 %v572, 1069105081
      %v618 = vpow.bf16.pop %v617
      %v620 = vmul.bf16 %v573, 1069105081
      %v621 = vpow.bf16.pop %v620
      %v623 = vmul.bf16 %v574, 1069105081
      %v624 = vpow.bf16.pop %v623
      %v626 = vmul.bf16 %v575, 1069105081
      %v627 = vpow.bf16.pop %v626
      %v629 = vmul.bf16 %v576, 1069105081
      %v630 = vpow.bf16.pop %v629
      %v632 = vmul.bf16 %v577, 1069105081
      %v633 = vpow.bf16.pop %v632
      %v635 = vmul.bf16 %v578, 1069105081
      %v636 = vpow.bf16.pop %v635
      %v638 = vmul.bf16 %v579, 1069105081
      %v639 = vpow.bf16.pop %v638
      %v641 = vmul.bf16 %v580, 1069105081
      %v642 = vpow.bf16.pop %v641
      %v644 = vmul.bf16 %v581, 1069105081
      %v645 = vpow.bf16.pop %v644
      %v646 = vsub.bf16 %v600, 1065369472
      %v647 = vsub.bf16 %v603, 1065369472
      %v648 = vsub.bf16 %v606, 1065369472
      %v649 = vsub.bf16 %v609, 1065369472
      %v650 = vsub.bf16 %v612, 1065369472
      %v651 = vsub.bf16 %v615, 1065369472
      %v652 = vsub.bf16 %v618, 1065369472
      %v653 = vsub.bf16 %v621, 1065369472
      %v654 = vsub.bf16 %v624, 1065369472
      %v655 = vsub.bf16 %v627, 1065369472
      %v656 = vsub.bf16 %v630, 1065369472
      %v657 = vsub.bf16 %v633, 1065369472
      %v658 = vsub.bf16 %v636, 1065369472
      %v659 = vsub.bf16 %v639, 1065369472
      %v660 = vsub.bf16 %v642, 1065369472
      %v661 = vsub.bf16 %v645, 1065369472
      %v662 = vsel %vm582, %v566, %v646
      %v663 = vsel %vm583, %v567, %v647
      %v664 = vsel %vm584, %v568, %v648
      %v665 = vsel %vm585, %v569, %v649
      %v666 = vsel %vm586, %v570, %v650
      %v667 = vsel %vm587, %v571, %v651
      %v668 = vsel %vm588, %v572, %v652
      %v669 = vsel %vm589, %v573, %v653
      %v670 = vsel %vm590, %v574, %v654
      %v671 = vsel %vm591, %v575, %v655
      %v672 = vsel %vm592, %v576, %v656
      %v673 = vsel %vm593, %v577, %v657
      %v674 = vsel %vm594, %v578, %v658
      %v675 = vsel %vm595, %v579, %v659
      %v676 = vsel %vm596, %v580, %v660
      %v677 = vsel %vm597, %v581, %v661
      %v678 = vld [vmem:[%s1 + $0x8] sm:$0xf]
      %v679 = vld [vmem:[%s1 + $0x20] sm:$0xf]
      %v680 = vld [vmem:[%s1 + $0x38] sm:$0xf]
      %v681 = vld [vmem:[%s1 + $0x50] sm:$0xf]
      %v682 = vld [vmem:[%s1 + $0x68] sm:$0xf]
      %v683 = vld [vmem:[%s1 + $0x80] sm:$0xf]
      %v684 = vld [vmem:[%s1 + $0x98] sm:$0xf]
      %v685 = vld [vmem:[%s1 + $0xb0] sm:$0xf]
      %v686 = vld [vmem:[%s1 + $0xc8] sm:$0xf]
      %v687 = vld [vmem:[%s1 + $0xe0] sm:$0xf]
      %v688 = vld [vmem:[%s1 + $0xf8] sm:$0xf]
      %v689 = vld [vmem:[%s1 + $0x110] sm:$0xf]
      %v690 = vld [vmem:[%s1 + $0x128] sm:$0xf]
      %v691 = vld [vmem:[%s1 + $0x140] sm:$0xf]
      %v692 = vld [vmem:[%s1 + $0x158] sm:$0xf]
      %v693 = vld [vmem:[%s1 + $0x170] sm:$0xf]
      %v710 = vunpack.c.l.b16 %v678
      %v711 = vunpack.c.l.b16 %v679
      %v712 = vunpack.c.l.b16 %v680
      %v713 = vunpack.c.l.b16 %v681
      %v714 = vunpack.c.l.b16 %v682
      %v715 = vunpack.c.l.b16 %v683
      %v716 = vunpack.c.l.b16 %v684
      %v717 = vunpack.c.l.b16 %v685
      %v718 = vunpack.c.l.b16 %v686
      %v719 = vunpack.c.l.b16 %v687
      %v720 = vunpack.c.l.b16 %v688
      %v721 = vunpack.c.l.b16 %v689
      %v722 = vunpack.c.l.b16 %v690
      %v723 = vunpack.c.l.b16 %v691
      %v724 = vunpack.c.l.b16 %v692
      %v725 = vunpack.c.l.b16 %v693
      %v726 = vpack.c.b16 %v711, %v710
      %v727 = vpack.c.b16 %v713, %v712
      %v728 = vpack.c.b16 %v715, %v714
      %v729 = vpack.c.b16 %v717, %v716
      %v730 = vpack.c.b16 %v719, %v718
      %v731 = vpack.c.b16 %v721, %v720
      %v732 = vpack.c.b16 %v723, %v722
      %v733 = vpack.c.b16 %v725, %v724
      %742 = vmatprep.subr.bf16.mxu0 0
      %743 = vmatpush1.bf16.msra.mxu0 %v726
      %744 = vmatprep.subr.bf16.mxu0 0
      %745 = vmatpush1.bf16.msra.mxu0 %v727
      %746 = vmatprep.subr.bf16.mxu0 0
      %747 = vmatpush1.bf16.msra.mxu0 %v728
      %748 = vmatprep.subr.bf16.mxu0 0
      %749 = vmatpush1.bf16.msra.mxu0 %v729
      %750 = vmatprep.subr.bf16.mxu0 0
      %751 = vmatpush1.bf16.msra.mxu0 %v730
      %752 = vmatprep.subr.bf16.mxu0 0
      %753 = vmatpush1.bf16.msra.mxu0 %v731
      %754 = vmatprep.subr.bf16.mxu0 0
      %755 = vmatpush1.bf16.msra.mxu0 %v732
      %756 = vmatprep.subr.bf16.mxu0 0
      %757 = vmatpush1.bf16.msra.mxu0 %v733
      %758 = vmatprep.subr.bf16.mxu0 0
      %759 = vmatpush1.bf16.msra.mxu0 0
      %760 = vmatprep.subr.bf16.mxu0 0
      %761 = vmatpush1.bf16.msra.mxu0 0
      %762 = vmatprep.subr.bf16.mxu0 0
      %763 = vmatpush1.bf16.msra.mxu0 0
      %764 = vmatprep.subr.bf16.mxu0 0
      %765 = vmatpush1.bf16.msra.mxu0 0
      %766 = vmatprep.subr.bf16.mxu0 0
      %767 = vmatpush1.bf16.msra.mxu0 0
      %768 = vmatprep.subr.bf16.mxu0 0
      %769 = vmatpush1.bf16.msra.mxu0 0
      %770 = vmatprep.subr.bf16.mxu0 0
      %771 = vmatpush1.bf16.msra.mxu0 0
      %772 = vmatprep.subr.bf16.mxu0 0
      %773 = vmatpush1.bf16.msra.mxu0 0
      %774 = vmatprep.mubr.bf16.mxu0 0
      %775 = vmatmul.mubr.bf16.gmra.mrb[0].mxu0 %v662
      %v776 = vpop.f32.mrb[0].mxu0
      %v777 = vadd.f32 0.0, %v776
      %v778 = vpop.f32.mrb[0].mxu0
      %v779 = vpop.f32.mrb[0].mxu0
      %v780 = vadd.f32 0.0, %v779
      %v781 = vpop.f32.mrb[0].mxu0
      %782 = vmatprep.mubr.bf16.mxu0 0
      %783 = vmatmul.mubr.bf16.gmra.mrb[0].mxu0 %v663
      %v784 = vpop.f32.mrb[0].mxu0
      %v785 = vadd.f32 0.0, %v784
      %v786 = vpop.f32.mrb[0].mxu0
      %v787 = vpop.f32.mrb[0].mxu0
      %v788 = vadd.f32 0.0, %v787
      %v789 = vpop.f32.mrb[0].mxu0
      %790 = vmatprep.mubr.bf16.mxu0 0
      %791 = vmatmul.mubr.bf16.gmra.mrb[0].mxu0 %v664
      %v792 = vpop.f32.mrb[0].mxu0
      %v793 = vadd.f32 0.0, %v792
      %v794 = vpop.f32.mrb[0].mxu0
      %v795 = vpop.f32.mrb[0].mxu0
      %v796 = vadd.f32 0.0, %v795
      %v797 = vpop.f32.mrb[0].mxu0
      %798 = vmatprep.mubr.bf16.mxu0 0
      %799 = vmatmul.mubr.bf16.gmra.mrb[0].mxu0 %v665
      %v800 = vpop.f32.mrb[0].mxu0
      %v801 = vadd.f32 0.0, %v800
      %v802 = vpop.f32.mrb[0].mxu0
      %v803 = vpop.f32.mrb[0].mxu0
      %v804 = vadd.f32 0.0, %v803
      %v805 = vpop.f32.mrb[0].mxu0
      %806 = vmatprep.mubr.bf16.mxu0 0
      %807 = vmatmul.mubr.bf16.gmra.mrb[0].mxu0 %v666
      %v808 = vpop.f32.mrb[0].mxu0
      %v809 = vadd.f32 0.0, %v808
      %v810 = vpop.f32.mrb[0].mxu0
      %v811 = vpop.f32.mrb[0].mxu0
      %v812 = vadd.f32 0.0, %v811
      %v813 = vpop.f32.mrb[0].mxu0
      %814 = vmatprep.mubr.bf16.mxu0 0
      %815 = vmatmul.mubr.bf16.gmra.mrb[0].mxu0 %v667
      %v816 = vpop.f32.mrb[0].mxu0
      %v817 = vadd.f32 0.0, %v816
      %v818 = vpop.f32.mrb[0].mxu0
      %v819 = vpop.f32.mrb[0].mxu0
      %v820 = vadd.f32 0.0, %v819
      %v821 = vpop.f32.mrb[0].mxu0
      %822 = vmatprep.mubr.bf16.mxu0 0
      %823 = vmatmul.mubr.bf16.gmra.mrb[0].mxu0 %v668
      %v824 = vpop.f32.mrb[0].mxu0
      %v825 = vadd.f32 0.0, %v824
      %v826 = vpop.f32.mrb[0].mxu0
      %v827 = vpop.f32.mrb[0].mxu0
      %v828 = vadd.f32 0.0, %v827
      %v829 = vpop.f32.mrb[0].mxu0
      %830 = vmatprep.mubr.bf16.mxu0 0
      %831 = vmatmul.mubr.bf16.gmra.mrb[0].mxu0 %v669
      %v832 = vpop.f32.mrb[0].mxu0
      %v833 = vadd.f32 0.0, %v832
      %v834 = vpop.f32.mrb[0].mxu0
      %v835 = vpop.f32.mrb[0].mxu0
      %v836 = vadd.f32 0.0, %v835
      %v837 = vpop.f32.mrb[0].mxu0
      %838 = vmatprep.mubr.bf16.mxu0 0
      %839 = vmatmul.mubr.bf16.gmra.mrb[0].mxu0 %v670
      %v840 = vpop.f32.mrb[0].mxu0
      %v841 = vadd.f32 0.0, %v840
      %v842 = vpop.f32.mrb[0].mxu0
      %v843 = vpop.f32.mrb[0].mxu0
      %v844 = vadd.f32 0.0, %v843
      %v845 = vpop.f32.mrb[0].mxu0
      %846 = vmatprep.mubr.bf16.mxu0 0
      %847 = vmatmul.mubr.bf16.gmra.mrb[0].mxu0 %v671
      %v848 = vpop.f32.mrb[0].mxu0
      %v849 = vadd.f32 0.0, %v848
      %v850 = vpop.f32.mrb[0].mxu0
      %v851 = vpop.f32.mrb[0].mxu0
      %v852 = vadd.f32 0.0, %v851
      %v853 = vpop.f32.mrb[0].mxu0
      %854 = vmatprep.mubr.bf16.mxu0 0
      %855 = vmatmul.mubr.bf16.gmra.mrb[0].mxu0 %v672
      %v856 = vpop.f32.mrb[0].mxu0
      %v857 = vadd.f32 0.0, %v856
      %v858 = vpop.f32.mrb[0].mxu0
      %v859 = vpop.f32.mrb[0].mxu0
      %v860 = vadd.f32 0.0, %v859
      %v861 = vpop.f32.mrb[0].mxu0
      %862 = vmatprep.mubr.bf16.mxu0 0
      %863 = vmatmul.mubr.bf16.gmra.mrb[0].mxu0 %v673
      %v864 = vpop.f32.mrb[0].mxu0
      %v865 = vadd.f32 0.0, %v864
      %v866 = vpop.f32.mrb[0].mxu0
      %v867 = vpop.f32.mrb[0].mxu0
      %v868 = vadd.f32 0.0, %v867
      %v869 = vpop.f32.mrb[0].mxu0
      %870 = vmatprep.mubr.bf16.mxu0 0
      %871 = vmatmul.mubr.bf16.gmra.mrb[0].mxu0 %v674
      %v872 = vpop.f32.mrb[0].mxu0
      %v873 = vadd.f32 0.0, %v872
      %v874 = vpop.f32.mrb[0].mxu0
      %v875 = vpop.f32.mrb[0].mxu0
      %v876 = vadd.f32 0.0, %v875
      %v877 = vpop.f32.mrb[0].mxu0
      %878 = vmatprep.mubr.bf16.mxu0 0
      %879 = vmatmul.mubr.bf16.gmra.mrb[0].mxu0 %v675
      %v880 = vpop.f32.mrb[0].mxu0
      %v881 = vadd.f32 0.0, %v880
      %v882 = vpop.f32.mrb[0].mxu0
      %v883 = vpop.f32.mrb[0].mxu0
      %v884 = vadd.f32 0.0, %v883
      %v885 = vpop.f32.mrb[0].mxu0
      %886 = vmatprep.mubr.bf16.mxu0 0
      %887 = vmatmul.mubr.bf16.gmra.mrb[0].mxu0 %v676
      %v888 = vpop.f32.mrb[0].mxu0
      %v889 = vadd.f32 0.0, %v888
      %v890 = vpop.f32.mrb[0].mxu0
      %v891 = vpop.f32.mrb[0].mxu0
      %v892 = vadd.f32 0.0, %v891
      %v893 = vpop.f32.mrb[0].mxu0
      %894 = vmatprep.mubr.bf16.mxu0 0
      %895 = vmatmul.mubr.bf16.gmra.mrb[0].mxu0 %v677
      %v896 = vpop.f32.mrb[0].mxu0
      %v897 = vadd.f32 0.0, %v896
      %v898 = vpop.f32.mrb[0].mxu0
      %v899 = vpop.f32.mrb[0].mxu0
      %v900 = vadd.f32 0.0, %v899
      %v901 = vpop.f32.mrb[0].mxu0
      %902 = vdwg.mxu0
      %v903 = vpack.c.bf16 %v780, %v777
      %v904 = vpack.c.bf16 %v788, %v785
      %v905 = vpack.c.bf16 %v796, %v793
      %v906 = vpack.c.bf16 %v804, %v801
      %v907 = vpack.c.bf16 %v812, %v809
      %v908 = vpack.c.bf16 %v820, %v817
      %v909 = vpack.c.bf16 %v828, %v825
      %v910 = vpack.c.bf16 %v836, %v833
      %v911 = vpack.c.bf16 %v844, %v841
      %v912 = vpack.c.bf16 %v852, %v849
      %v913 = vpack.c.bf16 %v860, %v857
      %v914 = vpack.c.bf16 %v868, %v865
      %v915 = vpack.c.bf16 %v876, %v873
      %v916 = vpack.c.bf16 %v884, %v881
      %v917 = vpack.c.bf16 %v892, %v889
      %v918 = vpack.c.bf16 %v900, %v897
      %vm919 = vcmp.gt.bf16.partialorder %v903, 0
      %vm920 = vcmp.gt.bf16.partialorder %v904, 0
      %vm921 = vcmp.gt.bf16.partialorder %v905, 0
      %vm922 = vcmp.gt.bf16.partialorder %v906, 0
      %vm923 = vcmp.gt.bf16.partialorder %v907, 0
      %vm924 = vcmp.gt.bf16.partialorder %v908, 0
      %vm925 = vcmp.gt.bf16.partialorder %v909, 0
      %vm926 = vcmp.gt.bf16.partialorder %v910, 0
      %vm927 = vcmp.gt.bf16.partialorder %v911, 0
      %vm928 = vcmp.gt.bf16.partialorder %v912, 0
      %vm929 = vcmp.gt.bf16.partialorder %v913, 0
      %vm930 = vcmp.gt.bf16.partialorder %v914, 0
      %vm931 = vcmp.gt.bf16.partialorder %v915, 0
      %vm932 = vcmp.gt.bf16.partialorder %v916, 0
      %vm933 = vcmp.gt.bf16.partialorder %v917, 0
      %vm934 = vcmp.gt.bf16.partialorder %v918, 0
      %v936 = vmul.bf16 %v903, 1069105081
      %v937 = vpow.bf16.pop %v936
      %v939 = vmul.bf16 %v904, 1069105081
      %v940 = vpow.bf16.pop %v939
      %v942 = vmul.bf16 %v905, 1069105081
      %v943 = vpow.bf16.pop %v942
      %v945 = vmul.bf16 %v906, 1069105081
      %v946 = vpow.bf16.pop %v945
      %v948 = vmul.bf16 %v907, 1069105081
      %v949 = vpow.bf16.pop %v948
      %v951 = vmul.bf16 %v908, 1069105081
      %v952 = vpow.bf16.pop %v951
      %v954 = vmul.bf16 %v909, 1069105081
      %v955 = vpow.bf16.pop %v954
      %v957 = vmul.bf16 %v910, 1069105081
      %v958 = vpow.bf16.pop %v957
      %v960 = vmul.bf16 %v911, 1069105081
      %v961 = vpow.bf16.pop %v960
      %v963 = vmul.bf16 %v912, 1069105081
      %v964 = vpow.bf16.pop %v963
      %v966 = vmul.bf16 %v913, 1069105081
      %v967 = vpow.bf16.pop %v966
      %v969 = vmul.bf16 %v914, 1069105081
      %v970 = vpow.bf16.pop %v969
      %v972 = vmul.bf16 %v915, 1069105081
      %v973 = vpow.bf16.pop %v972
      %v975 = vmul.bf16 %v916, 1069105081
      %v976 = vpow.bf16.pop %v975
      %v978 = vmul.bf16 %v917, 1069105081
      %v979 = vpow.bf16.pop %v978
      %v981 = vmul.bf16 %v918, 1069105081
      %v982 = vpow.bf16.pop %v981
      %v983 = vsub.bf16 %v937, 1065369472
      %v984 = vsub.bf16 %v940, 1065369472
      %v985 = vsub.bf16 %v943, 1065369472
      %v986 = vsub.bf16 %v946, 1065369472
      %v987 = vsub.bf16 %v949, 1065369472
      %v988 = vsub.bf16 %v952, 1065369472
      %v989 = vsub.bf16 %v955, 1065369472
      %v990 = vsub.bf16 %v958, 1065369472
      %v991 = vsub.bf16 %v961, 1065369472
      %v992 = vsub.bf16 %v964, 1065369472
      %v993 = vsub.bf16 %v967, 1065369472
      %v994 = vsub.bf16 %v970, 1065369472
      %v995 = vsub.bf16 %v973, 1065369472
      %v996 = vsub.bf16 %v976, 1065369472
      %v997 = vsub.bf16 %v979, 1065369472
      %v998 = vsub.bf16 %v982, 1065369472
      %v999 = vsel %vm919, %v903, %v983
      %v1000 = vsel %vm920, %v904, %v984
      %v1001 = vsel %vm921, %v905, %v985
      %v1002 = vsel %vm922, %v906, %v986
      %v1003 = vsel %vm923, %v907, %v987
      %v1004 = vsel %vm924, %v908, %v988
      %v1005 = vsel %vm925, %v909, %v989
      %v1006 = vsel %vm926, %v910, %v990
      %v1007 = vsel %vm927, %v911, %v991
      %v1008 = vsel %vm928, %v912, %v992
      %v1009 = vsel %vm929, %v913, %v993
      %v1010 = vsel %vm930, %v914, %v994
      %v1011 = vsel %vm931, %v915, %v995
      %v1012 = vsel %vm932, %v916, %v996
      %v1013 = vsel %vm933, %v917, %v997
      %v1014 = vsel %vm934, %v918, %v998
      %v1015 = vld [vmem:[%s1 + $0xc] sm:$0xf]
      %v1016 = vld [vmem:[%s1 + $0x24] sm:$0xf]
      %v1017 = vld [vmem:[%s1 + $0x3c] sm:$0xf]
      %v1018 = vld [vmem:[%s1 + $0x54] sm:$0xf]
      %v1019 = vld [vmem:[%s1 + $0x6c] sm:$0xf]
      %v1020 = vld [vmem:[%s1 + $0x84] sm:$0xf]
      %v1021 = vld [vmem:[%s1 + $0x9c] sm:$0xf]
      %v1022 = vld [vmem:[%s1 + $0xb4] sm:$0xf]
      %v1023 = vld [vmem:[%s1 + $0xcc] sm:$0xf]
      %v1024 = vld [vmem:[%s1 + $0xe4] sm:$0xf]
      %v1025 = vld [vmem:[%s1 + $0xfc] sm:$0xf]
      %v1026 = vld [vmem:[%s1 + $0x114] sm:$0xf]
      %v1027 = vld [vmem:[%s1 + $0x12c] sm:$0xf]
      %v1028 = vld [vmem:[%s1 + $0x144] sm:$0xf]
      %v1029 = vld [vmem:[%s1 + $0x15c] sm:$0xf]
      %v1030 = vld [vmem:[%s1 + $0x174] sm:$0xf]
      %v1047 = vunpack.c.l.b16 %v1015
      %v1048 = vunpack.c.l.b16 %v1016
      %v1049 = vunpack.c.l.b16 %v1017
      %v1050 = vunpack.c.l.b16 %v1018
      %v1051 = vunpack.c.l.b16 %v1019
      %v1052 = vunpack.c.l.b16 %v1020
      %v1053 = vunpack.c.l.b16 %v1021
      %v1054 = vunpack.c.l.b16 %v1022
      %v1055 = vunpack.c.l.b16 %v1023
      %v1056 = vunpack.c.l.b16 %v1024
      %v1057 = vunpack.c.l.b16 %v1025
      %v1058 = vunpack.c.l.b16 %v1026
      %v1059 = vunpack.c.l.b16 %v1027
      %v1060 = vunpack.c.l.b16 %v1028
      %v1061 = vunpack.c.l.b16 %v1029
      %v1062 = vunpack.c.l.b16 %v1030
      %v1063 = vpack.c.b16 %v1048, %v1047
      %v1064 = vpack.c.b16 %v1050, %v1049
      %v1065 = vpack.c.b16 %v1052, %v1051
      %v1066 = vpack.c.b16 %v1054, %v1053
      %v1067 = vpack.c.b16 %v1056, %v1055
      %v1068 = vpack.c.b16 %v1058, %v1057
      %v1069 = vpack.c.b16 %v1060, %v1059
      %v1070 = vpack.c.b16 %v1062, %v1061
      %1079 = vmatprep.subr.bf16.mxu0 0
      %1080 = vmatpush1.bf16.msra.mxu0 %v1063
      %1081 = vmatprep.subr.bf16.mxu0 0
      %1082 = vmatpush1.bf16.msra.mxu0 %v1064
      %1083 = vmatprep.subr.bf16.mxu0 0
      %1084 = vmatpush1.bf16.msra.mxu0 %v1065
      %1085 = vmatprep.subr.bf16.mxu0 0
      %1086 = vmatpush1.bf16.msra.mxu0 %v1066
      %1087 = vmatprep.subr.bf16.mxu0 0
      %1088 = vmatpush1.bf16.msra.mxu0 %v1067
      %1089 = vmatprep.subr.bf16.mxu0 0
      %1090 = vmatpush1.bf16.msra.mxu0 %v1068
      %1091 = vmatprep.subr.bf16.mxu0 0
      %1092 = vmatpush1.bf16.msra.mxu0 %v1069
      %1093 = vmatprep.subr.bf16.mxu0 0
      %1094 = vmatpush1.bf16.msra.mxu0 %v1070
      %1095 = vmatprep.subr.bf16.mxu0 0
      %1096 = vmatpush1.bf16.msra.mxu0 0
      %1097 = vmatprep.subr.bf16.mxu0 0
      %1098 = vmatpush1.bf16.msra.mxu0 0
      %1099 = vmatprep.subr.bf16.mxu0 0
      %1100 = vmatpush1.bf16.msra.mxu0 0
      %1101 = vmatprep.subr.bf16.mxu0 0
      %1102 = vmatpush1.bf16.msra.mxu0 0
      %1103 = vmatprep.subr.bf16.mxu0 0
      %1104 = vmatpush1.bf16.msra.mxu0 0
      %1105 = vmatprep.subr.bf16.mxu0 0
      %1106 = vmatpush1.bf16.msra.mxu0 0
      %1107 = vmatprep.subr.bf16.mxu0 0
      %1108 = vmatpush1.bf16.msra.mxu0 0
      %1109 = vmatprep.subr.bf16.mxu0 0
      %1110 = vmatpush1.bf16.msra.mxu0 0
      %1111 = vmatprep.mubr.bf16.mxu0 0
      %1112 = vmatmul.mubr.bf16.gmra.mrb[0].mxu0 %v999
      %v1113 = vpop.f32.mrb[0].mxu0
      %v1114 = vadd.f32 0.0, %v1113
      %v1115 = vpop.f32.mrb[0].mxu0
      %v1116 = vpop.f32.mrb[0].mxu0
      %v1117 = vadd.f32 0.0, %v1116
      %v1118 = vpop.f32.mrb[0].mxu0
      %1119 = vmatprep.mubr.bf16.mxu0 0
      %1120 = vmatmul.mubr.bf16.gmra.mrb[0].mxu0 %v1000
      %v1121 = vpop.f32.mrb[0].mxu0
      %v1122 = vadd.f32 0.0, %v1121
      %v1123 = vpop.f32.mrb[0].mxu0
      %v1124 = vpop.f32.mrb[0].mxu0
      %v1125 = vadd.f32 0.0, %v1124
      %v1126 = vpop.f32.mrb[0].mxu0
      %1127 = vmatprep.mubr.bf16.mxu0 0
      %1128 = vmatmul.mubr.bf16.gmra.mrb[0].mxu0 %v1001
      %v1129 = vpop.f32.mrb[0].mxu0
      %v1130 = vadd.f32 0.0, %v1129
      %v1131 = vpop.f32.mrb[0].mxu0
      %v1132 = vpop.f32.mrb[0].mxu0
      %v1133 = vadd.f32 0.0, %v1132
      %v1134 = vpop.f32.mrb[0].mxu0
      %1135 = vmatprep.mubr.bf16.mxu0 0
      %1136 = vmatmul.mubr.bf16.gmra.mrb[0].mxu0 %v1002
      %v1137 = vpop.f32.mrb[0].mxu0
      %v1138 = vadd.f32 0.0, %v1137
      %v1139 = vpop.f32.mrb[0].mxu0
      %v1140 = vpop.f32.mrb[0].mxu0
      %v1141 = vadd.f32 0.0, %v1140
      %v1142 = vpop.f32.mrb[0].mxu0
      %1143 = vmatprep.mubr.bf16.mxu0 0
      %1144 = vmatmul.mubr.bf16.gmra.mrb[0].mxu0 %v1003
      %v1145 = vpop.f32.mrb[0].mxu0
      %v1146 = vadd.f32 0.0, %v1145
      %v1147 = vpop.f32.mrb[0].mxu0
      %v1148 = vpop.f32.mrb[0].mxu0
      %v1149 = vadd.f32 0.0, %v1148
      %v1150 = vpop.f32.mrb[0].mxu0
      %1151 = vmatprep.mubr.bf16.mxu0 0
      %1152 = vmatmul.mubr.bf16.gmra.mrb[0].mxu0 %v1004
      %v1153 = vpop.f32.mrb[0].mxu0
      %v1154 = vadd.f32 0.0, %v1153
      %v1155 = vpop.f32.mrb[0].mxu0
      %v1156 = vpop.f32.mrb[0].mxu0
      %v1157 = vadd.f32 0.0, %v1156
      %v1158 = vpop.f32.mrb[0].mxu0
      %1159 = vmatprep.mubr.bf16.mxu0 0
      %1160 = vmatmul.mubr.bf16.gmra.mrb[0].mxu0 %v1005
      %v1161 = vpop.f32.mrb[0].mxu0
      %v1162 = vadd.f32 0.0, %v1161
      %v1163 = vpop.f32.mrb[0].mxu0
      %v1164 = vpop.f32.mrb[0].mxu0
      %v1165 = vadd.f32 0.0, %v1164
      %v1166 = vpop.f32.mrb[0].mxu0
      %1167 = vmatprep.mubr.bf16.mxu0 0
      %1168 = vmatmul.mubr.bf16.gmra.mrb[0].mxu0 %v1006
      %v1169 = vpop.f32.mrb[0].mxu0
      %v1170 = vadd.f32 0.0, %v1169
      %v1171 = vpop.f32.mrb[0].mxu0
      %v1172 = vpop.f32.mrb[0].mxu0
      %v1173 = vadd.f32 0.0, %v1172
      %v1174 = vpop.f32.mrb[0].mxu0
      %1175 = vmatprep.mubr.bf16.mxu0 0
      %1176 = vmatmul.mubr.bf16.gmra.mrb[0].mxu0 %v1007
      %v1177 = vpop.f32.mrb[0].mxu0
      %v1178 = vadd.f32 0.0, %v1177
      %v1179 = vpop.f32.mrb[0].mxu0
      %v1180 = vpop.f32.mrb[0].mxu0
      %v1181 = vadd.f32 0.0, %v1180
      %v1182 = vpop.f32.mrb[0].mxu0
      %1183 = vmatprep.mubr.bf16.mxu0 0
      %1184 = vmatmul.mubr.bf16.gmra.mrb[0].mxu0 %v1008
      %v1185 = vpop.f32.mrb[0].mxu0
      %v1186 = vadd.f32 0.0, %v1185
      %v1187 = vpop.f32.mrb[0].mxu0
      %v1188 = vpop.f32.mrb[0].mxu0
      %v1189 = vadd.f32 0.0, %v1188
      %v1190 = vpop.f32.mrb[0].mxu0
      %1191 = vmatprep.mubr.bf16.mxu0 0
      %1192 = vmatmul.mubr.bf16.gmra.mrb[0].mxu0 %v1009
      %v1193 = vpop.f32.mrb[0].mxu0
      %v1194 = vadd.f32 0.0, %v1193
      %v1195 = vpop.f32.mrb[0].mxu0
      %v1196 = vpop.f32.mrb[0].mxu0
      %v1197 = vadd.f32 0.0, %v1196
      %v1198 = vpop.f32.mrb[0].mxu0
      %1199 = vmatprep.mubr.bf16.mxu0 0
      %1200 = vmatmul.mubr.bf16.gmra.mrb[0].mxu0 %v1010
      %v1201 = vpop.f32.mrb[0].mxu0
      %v1202 = vadd.f32 0.0, %v1201
      %v1203 = vpop.f32.mrb[0].mxu0
      %v1204 = vpop.f32.mrb[0].mxu0
      %v1205 = vadd.f32 0.0, %v1204
      %v1206 = vpop.f32.mrb[0].mxu0
      %1207 = vmatprep.mubr.bf16.mxu0 0
      %1208 = vmatmul.mubr.bf16.gmra.mrb[0].mxu0 %v1011
      %v1209 = vpop.f32.mrb[0].mxu0
      %v1210 = vadd.f32 0.0, %v1209
      %v1211 = vpop.f32.mrb[0].mxu0
      %v1212 = vpop.f32.mrb[0].mxu0
      %v1213 = vadd.f32 0.0, %v1212
      %v1214 = vpop.f32.mrb[0].mxu0
      %1215 = vmatprep.mubr.bf16.mxu0 0
      %1216 = vmatmul.mubr.bf16.gmra.mrb[0].mxu0 %v1012
      %v1217 = vpop.f32.mrb[0].mxu0
      %v1218 = vadd.f32 0.0, %v1217
      %v1219 = vpop.f32.mrb[0].mxu0
      %v1220 = vpop.f32.mrb[0].mxu0
      %v1221 = vadd.f32 0.0, %v1220
      %v1222 = vpop.f32.mrb[0].mxu0
      %1223 = vmatprep.mubr.bf16.mxu0 0
      %1224 = vmatmul.mubr.bf16.gmra.mrb[0].mxu0 %v1013
      %v1225 = vpop.f32.mrb[0].mxu0
      %v1226 = vadd.f32 0.0, %v1225
      %v1227 = vpop.f32.mrb[0].mxu0
      %v1228 = vpop.f32.mrb[0].mxu0
      %v1229 = vadd.f32 0.0, %v1228
      %v1230 = vpop.f32.mrb[0].mxu0
      %1231 = vmatprep.mubr.bf16.mxu0 0
      %1232 = vmatmul.mubr.bf16.gmra.mrb[0].mxu0 %v1014
      %v1233 = vpop.f32.mrb[0].mxu0
      %v1234 = vadd.f32 0.0, %v1233
      %v1235 = vpop.f32.mrb[0].mxu0
      %v1236 = vpop.f32.mrb[0].mxu0
      %v1237 = vadd.f32 0.0, %v1236
      %v1238 = vpop.f32.mrb[0].mxu0
      %1239 = vdwg.mxu0
      %v1240 = vadd.f32 %v408, %v1114
      %v1241 = vadd.f32 %v412, %v1117
      %v1242 = vadd.f32 %v418, %v1122
      %v1243 = vadd.f32 %v422, %v1125
      %v1244 = vadd.f32 %v428, %v1130
      %v1245 = vadd.f32 %v432, %v1133
      %v1246 = vadd.f32 %v438, %v1138
      %v1247 = vadd.f32 %v442, %v1141
      %v1248 = vadd.f32 %v448, %v1146
      %v1249 = vadd.f32 %v452, %v1149
      %v1250 = vadd.f32 %v458, %v1154
      %v1251 = vadd.f32 %v462, %v1157
      %v1252 = vadd.f32 %v468, %v1162
      %v1253 = vadd.f32 %v472, %v1165
      %v1254 = vadd.f32 %v478, %v1170
      %v1255 = vadd.f32 %v482, %v1173
      %v1256 = vadd.f32 %v488, %v1178
      %v1257 = vadd.f32 %v492, %v1181
      %v1258 = vadd.f32 %v498, %v1186
      %v1259 = vadd.f32 %v502, %v1189
      %v1260 = vadd.f32 %v508, %v1194
      %v1261 = vadd.f32 %v512, %v1197
      %v1262 = vadd.f32 %v518, %v1202
      %v1263 = vadd.f32 %v522, %v1205
      %v1264 = vadd.f32 %v528, %v1210
      %v1265 = vadd.f32 %v532, %v1213
      %v1266 = vadd.f32 %v538, %v1218
      %v1267 = vadd.f32 %v542, %v1221
      %v1268 = vadd.f32 %v548, %v1226
      %v1269 = vadd.f32 %v552, %v1229
      %v1270 = vadd.f32 %v558, %v1234
      %v1271 = vadd.f32 %v562, %v1237
      %v1272 = vpack.c.bf16 %v1241, %v1240
      %v1273 = vpack.c.bf16 %v1243, %v1242
      %v1274 = vpack.c.bf16 %v1245, %v1244
      %v1275 = vpack.c.bf16 %v1247, %v1246
      %v1276 = vpack.c.bf16 %v1249, %v1248
      %v1277 = vpack.c.bf16 %v1251, %v1250
      %v1278 = vpack.c.bf16 %v1253, %v1252
      %v1279 = vpack.c.bf16 %v1255, %v1254
      %v1280 = vpack.c.bf16 %v1257, %v1256
      %v1281 = vpack.c.bf16 %v1259, %v1258
      %v1282 = vpack.c.bf16 %v1261, %v1260
      %v1283 = vpack.c.bf16 %v1263, %v1262
      %v1284 = vpack.c.bf16 %v1265, %v1264
      %v1285 = vpack.c.bf16 %v1267, %v1266
      %v1286 = vpack.c.bf16 %v1269, %v1268
      %v1287 = vpack.c.bf16 %v1271, %v1270
      %vm1288 = vcmp.gt.bf16.partialorder %v1272, 0
      %vm1289 = vcmp.gt.bf16.partialorder %v1273, 0
      %vm1290 = vcmp.gt.bf16.partialorder %v1274, 0
      %vm1291 = vcmp.gt.bf16.partialorder %v1275, 0
      %vm1292 = vcmp.gt.bf16.partialorder %v1276, 0
      %vm1293 = vcmp.gt.bf16.partialorder %v1277, 0
      %vm1294 = vcmp.gt.bf16.partialorder %v1278, 0
      %vm1295 = vcmp.gt.bf16.partialorder %v1279, 0
      %vm1296 = vcmp.gt.bf16.partialorder %v1280, 0
      %vm1297 = vcmp.gt.bf16.partialorder %v1281, 0
      %vm1298 = vcmp.gt.bf16.partialorder %v1282, 0
      %vm1299 = vcmp.gt.bf16.partialorder %v1283, 0
      %vm1300 = vcmp.gt.bf16.partialorder %v1284, 0
      %vm1301 = vcmp.gt.bf16.partialorder %v1285, 0
      %vm1302 = vcmp.gt.bf16.partialorder %v1286, 0
      %vm1303 = vcmp.gt.bf16.partialorder %v1287, 0
      %v1305 = vmul.bf16 %v1272, 1069105081
      %v1306 = vpow.bf16.pop %v1305
      %v1308 = vmul.bf16 %v1273, 1069105081
      %v1309 = vpow.bf16.pop %v1308
      %v1311 = vmul.bf16 %v1274, 1069105081
      %v1312 = vpow.bf16.pop %v1311
      %v1314 = vmul.bf16 %v1275, 1069105081
      %v1315 = vpow.bf16.pop %v1314
      %v1317 = vmul.bf16 %v1276, 1069105081
      %v1318 = vpow.bf16.pop %v1317
      %v1320 = vmul.bf16 %v1277, 1069105081
      %v1321 = vpow.bf16.pop %v1320
      %v1323 = vmul.bf16 %v1278, 1069105081
      %v1324 = vpow.bf16.pop %v1323
      %v1326 = vmul.bf16 %v1279, 1069105081
      %v1327 = vpow.bf16.pop %v1326
      %v1329 = vmul.bf16 %v1280, 1069105081
      %v1330 = vpow.bf16.pop %v1329
      %v1332 = vmul.bf16 %v1281, 1069105081
      %v1333 = vpow.bf16.pop %v1332
      %v1335 = vmul.bf16 %v1282, 1069105081
      %v1336 = vpow.bf16.pop %v1335
      %v1338 = vmul.bf16 %v1283, 1069105081
      %v1339 = vpow.bf16.pop %v1338
      %v1341 = vmul.bf16 %v1284, 1069105081
      %v1342 = vpow.bf16.pop %v1341
      %v1344 = vmul.bf16 %v1285, 1069105081
      %v1345 = vpow.bf16.pop %v1344
      %v1347 = vmul.bf16 %v1286, 1069105081
      %v1348 = vpow.bf16.pop %v1347
      %v1350 = vmul.bf16 %v1287, 1069105081
      %v1351 = vpow.bf16.pop %v1350
      %v1352 = vsub.bf16 %v1306, 1065369472
      %v1353 = vsub.bf16 %v1309, 1065369472
      %v1354 = vsub.bf16 %v1312, 1065369472
      %v1355 = vsub.bf16 %v1315, 1065369472
      %v1356 = vsub.bf16 %v1318, 1065369472
      %v1357 = vsub.bf16 %v1321, 1065369472
      %v1358 = vsub.bf16 %v1324, 1065369472
      %v1359 = vsub.bf16 %v1327, 1065369472
      %v1360 = vsub.bf16 %v1330, 1065369472
      %v1361 = vsub.bf16 %v1333, 1065369472
      %v1362 = vsub.bf16 %v1336, 1065369472
      %v1363 = vsub.bf16 %v1339, 1065369472
      %v1364 = vsub.bf16 %v1342, 1065369472
      %v1365 = vsub.bf16 %v1345, 1065369472
      %v1366 = vsub.bf16 %v1348, 1065369472
      %v1367 = vsub.bf16 %v1351, 1065369472
      %v1368 = vsel %vm1288, %v1272, %v1352
      %v1369 = vsel %vm1289, %v1273, %v1353
      %v1370 = vsel %vm1290, %v1274, %v1354
      %v1371 = vsel %vm1291, %v1275, %v1355
      %v1372 = vsel %vm1292, %v1276, %v1356
      %v1373 = vsel %vm1293, %v1277, %v1357
      %v1374 = vsel %vm1294, %v1278, %v1358
      %v1375 = vsel %vm1295, %v1279, %v1359
      %v1376 = vsel %vm1296, %v1280, %v1360
      %v1377 = vsel %vm1297, %v1281, %v1361
      %v1378 = vsel %vm1298, %v1282, %v1362
      %v1379 = vsel %vm1299, %v1283, %v1363
      %v1380 = vsel %vm1300, %v1284, %v1364
      %v1381 = vsel %vm1301, %v1285, %v1365
      %v1382 = vsel %vm1302, %v1286, %v1366
      %v1383 = vsel %vm1303, %v1287, %v1367
      %v1384 = vld [vmem:[%s1 + $0x10] sm:$0xf]
      %v1385 = vld [vmem:[%s1 + $0x28] sm:$0xf]
      %v1386 = vld [vmem:[%s1 + $0x40] sm:$0xf]
      %v1387 = vld [vmem:[%s1 + $0x58] sm:$0xf]
      %v1388 = vld [vmem:[%s1 + $0x70] sm:$0xf]
      %v1389 = vld [vmem:[%s1 + $0x88] sm:$0xf]
      %v1390 = vld [vmem:[%s1 + $0xa0] sm:$0xf]
      %v1391 = vld [vmem:[%s1 + $0xb8] sm:$0xf]
      %v1392 = vld [vmem:[%s1 + $0xd0] sm:$0xf]
      %v1393 = vld [vmem:[%s1 + $0xe8] sm:$0xf]
      %v1394 = vld [vmem:[%s1 + $0x100] sm:$0xf]
      %v1395 = vld [vmem:[%s1 + $0x118] sm:$0xf]
      %v1396 = vld [vmem:[%s1 + $0x130] sm:$0xf]
      %v1397 = vld [vmem:[%s1 + $0x148] sm:$0xf]
      %v1398 = vld [vmem:[%s1 + $0x160] sm:$0xf]
      %v1399 = vld [vmem:[%s1 + $0x178] sm:$0xf]
      %v1416 = vunpack.c.l.b16 %v1384
      %v1417 = vunpack.c.l.b16 %v1385
      %v1418 = vunpack.c.l.b16 %v1386
      %v1419 = vunpack.c.l.b16 %v1387
      %v1420 = vunpack.c.l.b16 %v1388
      %v1421 = vunpack.c.l.b16 %v1389
      %v1422 = vunpack.c.l.b16 %v1390
      %v1423 = vunpack.c.l.b16 %v1391
      %v1424 = vunpack.c.l.b16 %v1392
      %v1425 = vunpack.c.l.b16 %v1393
      %v1426 = vunpack.c.l.b16 %v1394
      %v1427 = vunpack.c.l.b16 %v1395
      %v1428 = vunpack.c.l.b16 %v1396
      %v1429 = vunpack.c.l.b16 %v1397
      %v1430 = vunpack.c.l.b16 %v1398
      %v1431 = vunpack.c.l.b16 %v1399
      %v1432 = vpack.c.b16 %v1417, %v1416
      %v1433 = vpack.c.b16 %v1419, %v1418
      %v1434 = vpack.c.b16 %v1421, %v1420
      %v1435 = vpack.c.b16 %v1423, %v1422
      %v1436 = vpack.c.b16 %v1425, %v1424
      %v1437 = vpack.c.b16 %v1427, %v1426
      %v1438 = vpack.c.b16 %v1429, %v1428
      %v1439 = vpack.c.b16 %v1431, %v1430
      %1448 = vmatprep.subr.bf16.mxu0 0
      %1449 = vmatpush1.bf16.msra.mxu0 %v1432
      %1450 = vmatprep.subr.bf16.mxu0 0
      %1451 = vmatpush1.bf16.msra.mxu0 %v1433
      %1452 = vmatprep.subr.bf16.mxu0 0
      %1453 = vmatpush1.bf16.msra.mxu0 %v1434
      %1454 = vmatprep.subr.bf16.mxu0 0
      %1455 = vmatpush1.bf16.msra.mxu0 %v1435
      %1456 = vmatprep.subr.bf16.mxu0 0
      %1457 = vmatpush1.bf16.msra.mxu0 %v1436
      %1458 = vmatprep.subr.bf16.mxu0 0
      %1459 = vmatpush1.bf16.msra.mxu0 %v1437
      %1460 = vmatprep.subr.bf16.mxu0 0
      %1461 = vmatpush1.bf16.msra.mxu0 %v1438
      %1462 = vmatprep.subr.bf16.mxu0 0
      %1463 = vmatpush1.bf16.msra.mxu0 %v1439
      %1464 = vmatprep.subr.bf16.mxu0 0
      %1465 = vmatpush1.bf16.msra.mxu0 0
      %1466 = vmatprep.subr.bf16.mxu0 0
      %1467 = vmatpush1.bf16.msra.mxu0 0
      %1468 = vmatprep.subr.bf16.mxu0 0
      %1469 = vmatpush1.bf16.msra.mxu0 0
      %1470 = vmatprep.subr.bf16.mxu0 0
      %1471 = vmatpush1.bf16.msra.mxu0 0
      %1472 = vmatprep.subr.bf16.mxu0 0
      %1473 = vmatpush1.bf16.msra.mxu0 0
      %1474 = vmatprep.subr.bf16.mxu0 0
      %1475 = vmatpush1.bf16.msra.mxu0 0
      %1476 = vmatprep.subr.bf16.mxu0 0
      %1477 = vmatpush1.bf16.msra.mxu0 0
      %1478 = vmatprep.subr.bf16.mxu0 0
      %1479 = vmatpush1.bf16.msra.mxu0 0
      %1480 = vmatprep.mubr.bf16.mxu0 0
      %1481 = vmatmul.mubr.bf16.gmra.mrb[0].mxu0 %v1368
      %v1482 = vpop.f32.mrb[0].mxu0
      %v1483 = vadd.f32 0.0, %v1482
      %v1484 = vpop.f32.mrb[0].mxu0
      %v1485 = vpop.f32.mrb[0].mxu0
      %v1486 = vadd.f32 0.0, %v1485
      %v1487 = vpop.f32.mrb[0].mxu0
      %1488 = vmatprep.mubr.bf16.mxu0 0
      %1489 = vmatmul.mubr.bf16.gmra.mrb[0].mxu0 %v1369
      %v1490 = vpop.f32.mrb[0].mxu0
      %v1491 = vadd.f32 0.0, %v1490
      %v1492 = vpop.f32.mrb[0].mxu0
      %v1493 = vpop.f32.mrb[0].mxu0
      %v1494 = vadd.f32 0.0, %v1493
      %v1495 = vpop.f32.mrb[0].mxu0
      %1496 = vmatprep.mubr.bf16.mxu0 0
      %1497 = vmatmul.mubr.bf16.gmra.mrb[0].mxu0 %v1370
      %v1498 = vpop.f32.mrb[0].mxu0
      %v1499 = vadd.f32 0.0, %v1498
      %v1500 = vpop.f32.mrb[0].mxu0
      %v1501 = vpop.f32.mrb[0].mxu0
      %v1502 = vadd.f32 0.0, %v1501
      %v1503 = vpop.f32.mrb[0].mxu0
      %1504 = vmatprep.mubr.bf16.mxu0 0
      %1505 = vmatmul.mubr.bf16.gmra.mrb[0].mxu0 %v1371
      %v1506 = vpop.f32.mrb[0].mxu0
      %v1507 = vadd.f32 0.0, %v1506
      %v1508 = vpop.f32.mrb[0].mxu0
      %v1509 = vpop.f32.mrb[0].mxu0
      %v1510 = vadd.f32 0.0, %v1509
      %v1511 = vpop.f32.mrb[0].mxu0
      %1512 = vmatprep.mubr.bf16.mxu0 0
      %1513 = vmatmul.mubr.bf16.gmra.mrb[0].mxu0 %v1372
      %v1514 = vpop.f32.mrb[0].mxu0
      %v1515 = vadd.f32 0.0, %v1514
      %v1516 = vpop.f32.mrb[0].mxu0
      %v1517 = vpop.f32.mrb[0].mxu0
      %v1518 = vadd.f32 0.0, %v1517
      %v1519 = vpop.f32.mrb[0].mxu0
      %1520 = vmatprep.mubr.bf16.mxu0 0
      %1521 = vmatmul.mubr.bf16.gmra.mrb[0].mxu0 %v1373
      %v1522 = vpop.f32.mrb[0].mxu0
      %v1523 = vadd.f32 0.0, %v1522
      %v1524 = vpop.f32.mrb[0].mxu0
      %v1525 = vpop.f32.mrb[0].mxu0
      %v1526 = vadd.f32 0.0, %v1525
      %v1527 = vpop.f32.mrb[0].mxu0
      %1528 = vmatprep.mubr.bf16.mxu0 0
      %1529 = vmatmul.mubr.bf16.gmra.mrb[0].mxu0 %v1374
      %v1530 = vpop.f32.mrb[0].mxu0
      %v1531 = vadd.f32 0.0, %v1530
      %v1532 = vpop.f32.mrb[0].mxu0
      %v1533 = vpop.f32.mrb[0].mxu0
      %v1534 = vadd.f32 0.0, %v1533
      %v1535 = vpop.f32.mrb[0].mxu0
      %1536 = vmatprep.mubr.bf16.mxu0 0
      %1537 = vmatmul.mubr.bf16.gmra.mrb[0].mxu0 %v1375
      %v1538 = vpop.f32.mrb[0].mxu0
      %v1539 = vadd.f32 0.0, %v1538
      %v1540 = vpop.f32.mrb[0].mxu0
      %v1541 = vpop.f32.mrb[0].mxu0
      %v1542 = vadd.f32 0.0, %v1541
      %v1543 = vpop.f32.mrb[0].mxu0
      %1544 = vmatprep.mubr.bf16.mxu0 0
      %1545 = vmatmul.mubr.bf16.gmra.mrb[0].mxu0 %v1376
      %v1546 = vpop.f32.mrb[0].mxu0
      %v1547 = vadd.f32 0.0, %v1546
      %v1548 = vpop.f32.mrb[0].mxu0
      %v1549 = vpop.f32.mrb[0].mxu0
      %v1550 = vadd.f32 0.0, %v1549
      %v1551 = vpop.f32.mrb[0].mxu0
      %1552 = vmatprep.mubr.bf16.mxu0 0
      %1553 = vmatmul.mubr.bf16.gmra.mrb[0].mxu0 %v1377
      %v1554 = vpop.f32.mrb[0].mxu0
      %v1555 = vadd.f32 0.0, %v1554
      %v1556 = vpop.f32.mrb[0].mxu0
      %v1557 = vpop.f32.mrb[0].mxu0
      %v1558 = vadd.f32 0.0, %v1557
      %v1559 = vpop.f32.mrb[0].mxu0
      %1560 = vmatprep.mubr.bf16.mxu0 0
      %1561 = vmatmul.mubr.bf16.gmra.mrb[0].mxu0 %v1378
      %v1562 = vpop.f32.mrb[0].mxu0
      %v1563 = vadd.f32 0.0, %v1562
      %v1564 = vpop.f32.mrb[0].mxu0
      %v1565 = vpop.f32.mrb[0].mxu0
      %v1566 = vadd.f32 0.0, %v1565
      %v1567 = vpop.f32.mrb[0].mxu0
      %1568 = vmatprep.mubr.bf16.mxu0 0
      %1569 = vmatmul.mubr.bf16.gmra.mrb[0].mxu0 %v1379
      %v1570 = vpop.f32.mrb[0].mxu0
      %v1571 = vadd.f32 0.0, %v1570
      %v1572 = vpop.f32.mrb[0].mxu0
      %v1573 = vpop.f32.mrb[0].mxu0
      %v1574 = vadd.f32 0.0, %v1573
      %v1575 = vpop.f32.mrb[0].mxu0
      %1576 = vmatprep.mubr.bf16.mxu0 0
      %1577 = vmatmul.mubr.bf16.gmra.mrb[0].mxu0 %v1380
      %v1578 = vpop.f32.mrb[0].mxu0
      %v1579 = vadd.f32 0.0, %v1578
      %v1580 = vpop.f32.mrb[0].mxu0
      %v1581 = vpop.f32.mrb[0].mxu0
      %v1582 = vadd.f32 0.0, %v1581
      %v1583 = vpop.f32.mrb[0].mxu0
      %1584 = vmatprep.mubr.bf16.mxu0 0
      %1585 = vmatmul.mubr.bf16.gmra.mrb[0].mxu0 %v1381
      %v1586 = vpop.f32.mrb[0].mxu0
      %v1587 = vadd.f32 0.0, %v1586
      %v1588 = vpop.f32.mrb[0].mxu0
      %v1589 = vpop.f32.mrb[0].mxu0
      %v1590 = vadd.f32 0.0, %v1589
      %v1591 = vpop.f32.mrb[0].mxu0
      %1592 = vmatprep.mubr.bf16.mxu0 0
      %1593 = vmatmul.mubr.bf16.gmra.mrb[0].mxu0 %v1382
      %v1594 = vpop.f32.mrb[0].mxu0
      %v1595 = vadd.f32 0.0, %v1594
      %v1596 = vpop.f32.mrb[0].mxu0
      %v1597 = vpop.f32.mrb[0].mxu0
      %v1598 = vadd.f32 0.0, %v1597
      %v1599 = vpop.f32.mrb[0].mxu0
      %1600 = vmatprep.mubr.bf16.mxu0 0
      %1601 = vmatmul.mubr.bf16.gmra.mrb[0].mxu0 %v1383
      %v1602 = vpop.f32.mrb[0].mxu0
      %v1603 = vadd.f32 0.0, %v1602
      %v1604 = vpop.f32.mrb[0].mxu0
      %v1605 = vpop.f32.mrb[0].mxu0
      %v1606 = vadd.f32 0.0, %v1605
      %v1607 = vpop.f32.mrb[0].mxu0
      %1608 = vdwg.mxu0
      %v1609 = vpack.c.bf16 %v1486, %v1483
      %v1610 = vpack.c.bf16 %v1494, %v1491
      %v1611 = vpack.c.bf16 %v1502, %v1499
      %v1612 = vpack.c.bf16 %v1510, %v1507
      %v1613 = vpack.c.bf16 %v1518, %v1515
      %v1614 = vpack.c.bf16 %v1526, %v1523
      %v1615 = vpack.c.bf16 %v1534, %v1531
      %v1616 = vpack.c.bf16 %v1542, %v1539
      %v1617 = vpack.c.bf16 %v1550, %v1547
      %v1618 = vpack.c.bf16 %v1558, %v1555
      %v1619 = vpack.c.bf16 %v1566, %v1563
      %v1620 = vpack.c.bf16 %v1574, %v1571
      %v1621 = vpack.c.bf16 %v1582, %v1579
      %v1622 = vpack.c.bf16 %v1590, %v1587
      %v1623 = vpack.c.bf16 %v1598, %v1595
      %v1624 = vpack.c.bf16 %v1606, %v1603
      %vm1625 = vcmp.gt.bf16.partialorder %v1609, 0
      %vm1626 = vcmp.gt.bf16.partialorder %v1610, 0
      %vm1627 = vcmp.gt.bf16.partialorder %v1611, 0
      %vm1628 = vcmp.gt.bf16.partialorder %v1612, 0
      %vm1629 = vcmp.gt.bf16.partialorder %v1613, 0
      %vm1630 = vcmp.gt.bf16.partialorder %v1614, 0
      %vm1631 = vcmp.gt.bf16.partialorder %v1615, 0
      %vm1632 = vcmp.gt.bf16.partialorder %v1616, 0
      %vm1633 = vcmp.gt.bf16.partialorder %v1617, 0
      %vm1634 = vcmp.gt.bf16.partialorder %v1618, 0
      %vm1635 = vcmp.gt.bf16.partialorder %v1619, 0
      %vm1636 = vcmp.gt.bf16.partialorder %v1620, 0
      %vm1637 = vcmp.gt.bf16.partialorder %v1621, 0
      %vm1638 = vcmp.gt.bf16.partialorder %v1622, 0
      %vm1639 = vcmp.gt.bf16.partialorder %v1623, 0
      %vm1640 = vcmp.gt.bf16.partialorder %v1624, 0
      %v1642 = vmul.bf16 %v1609, 1069105081
      %v1643 = vpow.bf16.pop %v1642
      %v1645 = vmul.bf16 %v1610, 1069105081
      %v1646 = vpow.bf16.pop %v1645
      %v1648 = vmul.bf16 %v1611, 1069105081
      %v1649 = vpow.bf16.pop %v1648
      %v1651 = vmul.bf16 %v1612, 1069105081
      %v1652 = vpow.bf16.pop %v1651
      %v1654 = vmul.bf16 %v1613, 1069105081
      %v1655 = vpow.bf16.pop %v1654
      %v1657 = vmul.bf16 %v1614, 1069105081
      %v1658 = vpow.bf16.pop %v1657
      %v1660 = vmul.bf16 %v1615, 1069105081
      %v1661 = vpow.bf16.pop %v1660
      %v1663 = vmul.bf16 %v1616, 1069105081
      %v1664 = vpow.bf16.pop %v1663
      %v1666 = vmul.bf16 %v1617, 1069105081
      %v1667 = vpow.bf16.pop %v1666
      %v1669 = vmul.bf16 %v1618, 1069105081
      %v1670 = vpow.bf16.pop %v1669
      %v1672 = vmul.bf16 %v1619, 1069105081
      %v1673 = vpow.bf16.pop %v1672
      %v1675 = vmul.bf16 %v1620, 1069105081
      %v1676 = vpow.bf16.pop %v1675
      %v1678 = vmul.bf16 %v1621, 1069105081
      %v1679 = vpow.bf16.pop %v1678
      %v1681 = vmul.bf16 %v1622, 1069105081
      %v1682 = vpow.bf16.pop %v1681
      %v1684 = vmul.bf16 %v1623, 1069105081
      %v1685 = vpow.bf16.pop %v1684
      %v1687 = vmul.bf16 %v1624, 1069105081
      %v1688 = vpow.bf16.pop %v1687
      %v1689 = vsub.bf16 %v1643, 1065369472
      %v1690 = vsub.bf16 %v1646, 1065369472
      %v1691 = vsub.bf16 %v1649, 1065369472
      %v1692 = vsub.bf16 %v1652, 1065369472
      %v1693 = vsub.bf16 %v1655, 1065369472
      %v1694 = vsub.bf16 %v1658, 1065369472
      %v1695 = vsub.bf16 %v1661, 1065369472
      %v1696 = vsub.bf16 %v1664, 1065369472
      %v1697 = vsub.bf16 %v1667, 1065369472
      %v1698 = vsub.bf16 %v1670, 1065369472
      %v1699 = vsub.bf16 %v1673, 1065369472
      %v1700 = vsub.bf16 %v1676, 1065369472
      %v1701 = vsub.bf16 %v1679, 1065369472
      %v1702 = vsub.bf16 %v1682, 1065369472
      %v1703 = vsub.bf16 %v1685, 1065369472
      %v1704 = vsub.bf16 %v1688, 1065369472
      %v1705 = vsel %vm1625, %v1609, %v1689
      %v1706 = vsel %vm1626, %v1610, %v1690
      %v1707 = vsel %vm1627, %v1611, %v1691
      %v1708 = vsel %vm1628, %v1612, %v1692
      %v1709 = vsel %vm1629, %v1613, %v1693
      %v1710 = vsel %vm1630, %v1614, %v1694
      %v1711 = vsel %vm1631, %v1615, %v1695
      %v1712 = vsel %vm1632, %v1616, %v1696
      %v1713 = vsel %vm1633, %v1617, %v1697
      %v1714 = vsel %vm1634, %v1618, %v1698
      %v1715 = vsel %vm1635, %v1619, %v1699
      %v1716 = vsel %vm1636, %v1620, %v1700
      %v1717 = vsel %vm1637, %v1621, %v1701
      %v1718 = vsel %vm1638, %v1622, %v1702
      %v1719 = vsel %vm1639, %v1623, %v1703
      %v1720 = vsel %vm1640, %v1624, %v1704
      %v1721 = vld [vmem:[%s1 + $0x14] sm:$0xf]
      %v1722 = vld [vmem:[%s1 + $0x2c] sm:$0xf]
      %v1723 = vld [vmem:[%s1 + $0x44] sm:$0xf]
      %v1724 = vld [vmem:[%s1 + $0x5c] sm:$0xf]
      %v1725 = vld [vmem:[%s1 + $0x74] sm:$0xf]
      %v1726 = vld [vmem:[%s1 + $0x8c] sm:$0xf]
      %v1727 = vld [vmem:[%s1 + $0xa4] sm:$0xf]
      %v1728 = vld [vmem:[%s1 + $0xbc] sm:$0xf]
      %v1729 = vld [vmem:[%s1 + $0xd4] sm:$0xf]
      %v1730 = vld [vmem:[%s1 + $0xec] sm:$0xf]
      %v1731 = vld [vmem:[%s1 + $0x104] sm:$0xf]
      %v1732 = vld [vmem:[%s1 + $0x11c] sm:$0xf]
      %v1733 = vld [vmem:[%s1 + $0x134] sm:$0xf]
      %v1734 = vld [vmem:[%s1 + $0x14c] sm:$0xf]
      %v1735 = vld [vmem:[%s1 + $0x164] sm:$0xf]
      %v1736 = vld [vmem:[%s1 + $0x17c] sm:$0xf]
      %v1753 = vunpack.c.l.b16 %v1721
      %v1754 = vunpack.c.l.b16 %v1722
      %v1755 = vunpack.c.l.b16 %v1723
      %v1756 = vunpack.c.l.b16 %v1724
      %v1757 = vunpack.c.l.b16 %v1725
      %v1758 = vunpack.c.l.b16 %v1726
      %v1759 = vunpack.c.l.b16 %v1727
      %v1760 = vunpack.c.l.b16 %v1728
      %v1761 = vunpack.c.l.b16 %v1729
      %v1762 = vunpack.c.l.b16 %v1730
      %v1763 = vunpack.c.l.b16 %v1731
      %v1764 = vunpack.c.l.b16 %v1732
      %v1765 = vunpack.c.l.b16 %v1733
      %v1766 = vunpack.c.l.b16 %v1734
      %v1767 = vunpack.c.l.b16 %v1735
      %v1768 = vunpack.c.l.b16 %v1736
      %v1769 = vpack.c.b16 %v1754, %v1753
      %v1770 = vpack.c.b16 %v1756, %v1755
      %v1771 = vpack.c.b16 %v1758, %v1757
      %v1772 = vpack.c.b16 %v1760, %v1759
      %v1773 = vpack.c.b16 %v1762, %v1761
      %v1774 = vpack.c.b16 %v1764, %v1763
      %v1775 = vpack.c.b16 %v1766, %v1765
      %v1776 = vpack.c.b16 %v1768, %v1767
      %1785 = vmatprep.subr.bf16.mxu0 0
      %1786 = vmatpush1.bf16.msra.mxu0 %v1769
      %1787 = vmatprep.subr.bf16.mxu0 0
      %1788 = vmatpush1.bf16.msra.mxu0 %v1770
      %1789 = vmatprep.subr.bf16.mxu0 0
      %1790 = vmatpush1.bf16.msra.mxu0 %v1771
      %1791 = vmatprep.subr.bf16.mxu0 0
      %1792 = vmatpush1.bf16.msra.mxu0 %v1772
      %1793 = vmatprep.subr.bf16.mxu0 0
      %1794 = vmatpush1.bf16.msra.mxu0 %v1773
      %1795 = vmatprep.subr.bf16.mxu0 0
      %1796 = vmatpush1.bf16.msra.mxu0 %v1774
      %1797 = vmatprep.subr.bf16.mxu0 0
      %1798 = vmatpush1.bf16.msra.mxu0 %v1775
      %1799 = vmatprep.subr.bf16.mxu0 0
      %1800 = vmatpush1.bf16.msra.mxu0 %v1776
      %1801 = vmatprep.subr.bf16.mxu0 0
      %1802 = vmatpush1.bf16.msra.mxu0 0
      %1803 = vmatprep.subr.bf16.mxu0 0
      %1804 = vmatpush1.bf16.msra.mxu0 0
      %1805 = vmatprep.subr.bf16.mxu0 0
      %1806 = vmatpush1.bf16.msra.mxu0 0
      %1807 = vmatprep.subr.bf16.mxu0 0
      %1808 = vmatpush1.bf16.msra.mxu0 0
      %1809 = vmatprep.subr.bf16.mxu0 0
      %1810 = vmatpush1.bf16.msra.mxu0 0
      %1811 = vmatprep.subr.bf16.mxu0 0
      %1812 = vmatpush1.bf16.msra.mxu0 0
      %1813 = vmatprep.subr.bf16.mxu0 0
      %1814 = vmatpush1.bf16.msra.mxu0 0
      %1815 = vmatprep.subr.bf16.mxu0 0
      %1816 = vmatpush1.bf16.msra.mxu0 0
      %1817 = vmatprep.mubr.bf16.mxu0 0
      %1818 = vmatmul.mubr.bf16.gmra.mrb[0].mxu0 %v1705
      %v1819 = vpop.f32.mrb[0].mxu0
      %v1820 = vadd.f32 0.0, %v1819
      %v1821 = vpop.f32.mrb[0].mxu0
      %v1822 = vpop.f32.mrb[0].mxu0
      %v1823 = vadd.f32 0.0, %v1822
      %v1824 = vpop.f32.mrb[0].mxu0
      %1825 = vmatprep.mubr.bf16.mxu0 0
      %1826 = vmatmul.mubr.bf16.gmra.mrb[0].mxu0 %v1706
      %v1827 = vpop.f32.mrb[0].mxu0
      %v1828 = vadd.f32 0.0, %v1827
      %v1829 = vpop.f32.mrb[0].mxu0
      %v1830 = vpop.f32.mrb[0].mxu0
      %v1831 = vadd.f32 0.0, %v1830
      %v1832 = vpop.f32.mrb[0].mxu0
      %1833 = vmatprep.mubr.bf16.mxu0 0
      %1834 = vmatmul.mubr.bf16.gmra.mrb[0].mxu0 %v1707
      %v1835 = vpop.f32.mrb[0].mxu0
      %v1836 = vadd.f32 0.0, %v1835
      %v1837 = vpop.f32.mrb[0].mxu0
      %v1838 = vpop.f32.mrb[0].mxu0
      %v1839 = vadd.f32 0.0, %v1838
      %v1840 = vpop.f32.mrb[0].mxu0
      %1841 = vmatprep.mubr.bf16.mxu0 0
      %1842 = vmatmul.mubr.bf16.gmra.mrb[0].mxu0 %v1708
      %v1843 = vpop.f32.mrb[0].mxu0
      %v1844 = vadd.f32 0.0, %v1843
      %v1845 = vpop.f32.mrb[0].mxu0
      %v1846 = vpop.f32.mrb[0].mxu0
      %v1847 = vadd.f32 0.0, %v1846
      %v1848 = vpop.f32.mrb[0].mxu0
      %1849 = vmatprep.mubr.bf16.mxu0 0
      %1850 = vmatmul.mubr.bf16.gmra.mrb[0].mxu0 %v1709
      %v1851 = vpop.f32.mrb[0].mxu0
      %v1852 = vadd.f32 0.0, %v1851
      %v1853 = vpop.f32.mrb[0].mxu0
      %v1854 = vpop.f32.mrb[0].mxu0
      %v1855 = vadd.f32 0.0, %v1854
      %v1856 = vpop.f32.mrb[0].mxu0
      %1857 = vmatprep.mubr.bf16.mxu0 0
      %1858 = vmatmul.mubr.bf16.gmra.mrb[0].mxu0 %v1710
      %v1859 = vpop.f32.mrb[0].mxu0
      %v1860 = vadd.f32 0.0, %v1859
      %v1861 = vpop.f32.mrb[0].mxu0
      %v1862 = vpop.f32.mrb[0].mxu0
      %v1863 = vadd.f32 0.0, %v1862
      %v1864 = vpop.f32.mrb[0].mxu0
      %1865 = vmatprep.mubr.bf16.mxu0 0
      %1866 = vmatmul.mubr.bf16.gmra.mrb[0].mxu0 %v1711
      %v1867 = vpop.f32.mrb[0].mxu0
      %v1868 = vadd.f32 0.0, %v1867
      %v1869 = vpop.f32.mrb[0].mxu0
      %v1870 = vpop.f32.mrb[0].mxu0
      %v1871 = vadd.f32 0.0, %v1870
      %v1872 = vpop.f32.mrb[0].mxu0
      %1873 = vmatprep.mubr.bf16.mxu0 0
      %1874 = vmatmul.mubr.bf16.gmra.mrb[0].mxu0 %v1712
      %v1875 = vpop.f32.mrb[0].mxu0
      %v1876 = vadd.f32 0.0, %v1875
      %v1877 = vpop.f32.mrb[0].mxu0
      %v1878 = vpop.f32.mrb[0].mxu0
      %v1879 = vadd.f32 0.0, %v1878
      %v1880 = vpop.f32.mrb[0].mxu0
      %1881 = vmatprep.mubr.bf16.mxu0 0
      %1882 = vmatmul.mubr.bf16.gmra.mrb[0].mxu0 %v1713
      %v1883 = vpop.f32.mrb[0].mxu0
      %v1884 = vadd.f32 0.0, %v1883
      %v1885 = vpop.f32.mrb[0].mxu0
      %v1886 = vpop.f32.mrb[0].mxu0
      %v1887 = vadd.f32 0.0, %v1886
      %v1888 = vpop.f32.mrb[0].mxu0
      %1889 = vmatprep.mubr.bf16.mxu0 0
      %1890 = vmatmul.mubr.bf16.gmra.mrb[0].mxu0 %v1714
      %v1891 = vpop.f32.mrb[0].mxu0
      %v1892 = vadd.f32 0.0, %v1891
      %v1893 = vpop.f32.mrb[0].mxu0
      %v1894 = vpop.f32.mrb[0].mxu0
      %v1895 = vadd.f32 0.0, %v1894
      %v1896 = vpop.f32.mrb[0].mxu0
      %1897 = vmatprep.mubr.bf16.mxu0 0
      %1898 = vmatmul.mubr.bf16.gmra.mrb[0].mxu0 %v1715
      %v1899 = vpop.f32.mrb[0].mxu0
      %v1900 = vadd.f32 0.0, %v1899
      %v1901 = vpop.f32.mrb[0].mxu0
      %v1902 = vpop.f32.mrb[0].mxu0
      %v1903 = vadd.f32 0.0, %v1902
      %v1904 = vpop.f32.mrb[0].mxu0
      %1905 = vmatprep.mubr.bf16.mxu0 0
      %1906 = vmatmul.mubr.bf16.gmra.mrb[0].mxu0 %v1716
      %v1907 = vpop.f32.mrb[0].mxu0
      %v1908 = vadd.f32 0.0, %v1907
      %v1909 = vpop.f32.mrb[0].mxu0
      %v1910 = vpop.f32.mrb[0].mxu0
      %v1911 = vadd.f32 0.0, %v1910
      %v1912 = vpop.f32.mrb[0].mxu0
      %1913 = vmatprep.mubr.bf16.mxu0 0
      %1914 = vmatmul.mubr.bf16.gmra.mrb[0].mxu0 %v1717
      %v1915 = vpop.f32.mrb[0].mxu0
      %v1916 = vadd.f32 0.0, %v1915
      %v1917 = vpop.f32.mrb[0].mxu0
      %v1918 = vpop.f32.mrb[0].mxu0
      %v1919 = vadd.f32 0.0, %v1918
      %v1920 = vpop.f32.mrb[0].mxu0
      %1921 = vmatprep.mubr.bf16.mxu0 0
      %1922 = vmatmul.mubr.bf16.gmra.mrb[0].mxu0 %v1718
      %v1923 = vpop.f32.mrb[0].mxu0
      %v1924 = vadd.f32 0.0, %v1923
      %v1925 = vpop.f32.mrb[0].mxu0
      %v1926 = vpop.f32.mrb[0].mxu0
      %v1927 = vadd.f32 0.0, %v1926
      %v1928 = vpop.f32.mrb[0].mxu0
      %1929 = vmatprep.mubr.bf16.mxu0 0
      %1930 = vmatmul.mubr.bf16.gmra.mrb[0].mxu0 %v1719
      %v1931 = vpop.f32.mrb[0].mxu0
      %v1932 = vadd.f32 0.0, %v1931
      %v1933 = vpop.f32.mrb[0].mxu0
      %v1934 = vpop.f32.mrb[0].mxu0
      %v1935 = vadd.f32 0.0, %v1934
      %v1936 = vpop.f32.mrb[0].mxu0
      %1937 = vmatprep.mubr.bf16.mxu0 0
      %1938 = vmatmul.mubr.bf16.gmra.mrb[0].mxu0 %v1720
      %v1939 = vpop.f32.mrb[0].mxu0
      %v1940 = vadd.f32 0.0, %v1939
      %v1941 = vpop.f32.mrb[0].mxu0
      %v1942 = vpop.f32.mrb[0].mxu0
      %v1943 = vadd.f32 0.0, %v1942
      %v1944 = vpop.f32.mrb[0].mxu0
      %1945 = vdwg.mxu0
      %1946 = vst [vmem:[%s145] sm:$0xff] %v1820
      %1947 = vst [vmem:[%s145 + $0x8] sm:$0xff] %v1823
      %1948 = vst [vmem:[%s145 + $0x10] sm:$0xff] %v1828
      %1949 = vst [vmem:[%s145 + $0x18] sm:$0xff] %v1831
      %1950 = vst [vmem:[%s145 + $0x20] sm:$0xff] %v1836
      %1951 = vst [vmem:[%s145 + $0x28] sm:$0xff] %v1839
      %1952 = vst [vmem:[%s145 + $0x30] sm:$0xff] %v1844
      %1953 = vst [vmem:[%s145 + $0x38] sm:$0xff] %v1847
      %1954 = vst [vmem:[%s145 + $0x40] sm:$0xff] %v1852
      %1955 = vst [vmem:[%s145 + $0x48] sm:$0xff] %v1855
      %1956 = vst [vmem:[%s145 + $0x50] sm:$0xff] %v1860
      %1957 = vst [vmem:[%s145 + $0x58] sm:$0xff] %v1863
      %1958 = vst [vmem:[%s145 + $0x60] sm:$0xff] %v1868
      %1959 = vst [vmem:[%s145 + $0x68] sm:$0xff] %v1871
      %1960 = vst [vmem:[%s145 + $0x70] sm:$0xff] %v1876
      %1961 = vst [vmem:[%s145 + $0x78] sm:$0xff] %v1879
      %1962 = vst [vmem:[%s145 + $0x80] sm:$0xff] %v1884
      %1963 = vst [vmem:[%s145 + $0x88] sm:$0xff] %v1887
      %1964 = vst [vmem:[%s145 + $0x90] sm:$0xff] %v1892
      %1965 = vst [vmem:[%s145 + $0x98] sm:$0xff] %v1895
      %1966 = vst [vmem:[%s145 + $0xa0] sm:$0xff] %v1900
      %1967 = vst [vmem:[%s145 + $0xa8] sm:$0xff] %v1903
      %1968 = vst [vmem:[%s145 + $0xb0] sm:$0xff] %v1908
      %1969 = vst [vmem:[%s145 + $0xb8] sm:$0xff] %v1911
      %1970 = vst [vmem:[%s145 + $0xc0] sm:$0xff] %v1916
      %1971 = vst [vmem:[%s145 + $0xc8] sm:$0xff] %v1919
      %1972 = vst [vmem:[%s145 + $0xd0] sm:$0xff] %v1924
      %1973 = vst [vmem:[%s145 + $0xd8] sm:$0xff] %v1927
      %1974 = vst [vmem:[%s145 + $0xe0] sm:$0xff] %v1932
      %1975 = vst [vmem:[%s145 + $0xe8] sm:$0xff] %v1935
      %1976 = vst [vmem:[%s145 + $0xf0] sm:$0xff] %v1940
      %1977 = vst [vmem:[%s145 + $0xf8] sm:$0xff] %v1943
      %s1978 = smul.u32 32, %s13
      %p1979 = scmp.lt.s32.totalorder %s1978, 63
      %s1980 = scalar_select %p1979, %s1978, 63
      %s1981 = smul.addr %s1980, 8
      %s1982 = scalar_lea.vmem %s2, %s1981
      // Predicated region
      $region29: #{imitation_forward.1} parent=27 // pred_check
        %p1983 = pneg %p78
      $region30: #{imitation_forward.1} parent=27 // pred_check_branch
        %1985 = sbr.rel (%p1983) target = $region32
      $region31: #{imitation_forward.1} parent=27 // pred_region
        %s1986 = smul.u32 32, %s13
      $region32: #{imitation_forward.1} parent=27 // pred_fallthru
        _
    $region28: #{imitation_forward.1} parent=5 // pred_fallthru
      _
    %p1987 = scmp.le.s32.totalorder 2, %s8
    // Predicated region
    $region33: #{imitation_forward.1} parent=5 // pred_check
      %p1988 = pneg %p1987
    $region34: #{imitation_forward.1} parent=5 // pred_check_branch
      %1990 = sbr.rel (%p1988) target = $region36
    $region35: #{imitation_forward.1} parent=5 // pred_region
      %s1991 = ssub.s32 %s8, 2
      // Predicated region
      $region37: #{imitation_forward.1} parent=35 // pred_check
        %p1992 = pneg %p84
      $region38: #{imitation_forward.1} parent=35 // pred_check_branch
        %1994 = sbr.rel (%p1992) target = $region40
      $region39: #{imitation_forward.1} parent=35 // pred_region
        %s1995 = smul.u32 32, %s14
        %p1996 = scmp.lt.s32.totalorder %s1995, 63
        %s1997 = scalar_select %p1996, %s1995, 63
        %s1998 = smul.addr %s1997, 8
        %s1999 = scalar_lea.vmem %s2, %s1998
      $region40: #{imitation_forward.1} parent=35 // pred_fallthru
        _
    $region36: #{imitation_forward.1} parent=5 // pred_fallthru
      _
  $region6: #{imitation_forward.1} parent=0 // loop_footer
    %s12 = sadd.s32 1, %s8
  $region7: #{imitation_forward.1} parent=0 // loop_footer_branch
    %7 = sbr.rel target = $region3
  $region8: #{imitation_forward.1} parent=0 // loop_exit
    _

</llo_original>
